<compile_context>
chip_gen: v7x
topology: tpu7x:2x2x1
jax: 0.10.0
libtpu: 0.0.40
codegen_flags: <defaults>
</compile_context>

<pallas_src>
import functools

import numpy as np
import jax
import jax.numpy as jnp
from jax import lax
from jax.experimental import pallas as pl
from jax.experimental.pallas import tpu as pltpu


# ----------------------------------------------------------------------------
# Fused Pallas kernel: whole DenseBlock for a block of batch elements.
# ----------------------------------------------------------------------------
def _dense_block_kernel(x_ref, dw_ref, pmat_ref, mask_ref, o_ref, *, H, W,
                        n_units=4):
    # x_ref   : (Nb, C, H*W)   input channels, H*W flattened on lanes
    # dw_ref  : (4, Ct, 11)    per-unit packed params:
    #                          cols 0..8 = 3x3 taps * dw BN scale (zero >= cin_u)
    #                          col 9 = dw BN bias
    #                          col 10 = pw BN bias placed at the unit's output rows
    # pmat_ref: (4, Ct, Ct)    per-unit 1x1 weights * pw BN scale, positioned at
    #                          the unit's output rows, zero elsewhere
    # mask_ref: (4, H*W)       border masks: left / right / up / down neighbour
    #                          exists (0/1), broadcast across channel sublanes
    # o_ref   : (Nb, Ct, H*W)  dense-block output (Ct = 2*C channels)
    Nb, C, HW = x_ref.shape
    Ct = o_ref.shape[1]

    w_left = mask_ref[0:1, :]    # (1, HW): (w-1) neighbour exists
    w_right = mask_ref[1:2, :]   # (1, HW): (w+1) neighbour exists
    h_up = mask_ref[2:3, :]      # (1, HW): (h-1) neighbour exists
    h_down = mask_ref[3:4, :]    # (1, HW): (h+1) neighbour exists

    for n in range(Nb):                      # batch elements in this block
        x = x_ref[n]
        # state: (Ct, HW). Rows [0, C) hold the input; the remaining rows are
        # the dense-concat slots filled by the 4 mobile_units.
        state = jnp.concatenate([x, jnp.zeros((Ct - C, HW), jnp.float32)],
                                axis=0)

        for u in range(n_units):             # 4 mobile_units, statically unrolled
            dwp = dw_ref[u]                  # (Ct, 11)
            pmat = pmat_ref[u]               # (Ct, Ct)

            # ---- depthwise 3x3 (pad=1, groups=cin) [separable] + BN + ReLU --
            # Horizontal shifts built once per unit; masks kill row/image wrap.
            s_m1 = pltpu.roll(state, shift=1, axis=1) * w_left       # (h, w-1)
            s_p1 = pltpu.roll(state, shift=HW - 1, axis=1) * w_right  # (h, w+1)

            # centre row (oh = 0): seeds the accumulator, no roll / h-mask.
            acc = dwp[:, 3:4] * s_m1 + dwp[:, 4:5] * state + dwp[:, 5:6] * s_p1
            # top row (oh = -1): one vertical roll + one h-mask.
            top = dwp[:, 0:1] * s_m1 + dwp[:, 1:2] * state + dwp[:, 2:3] * s_p1
            acc = acc + h_up * pltpu.roll(top, shift=W, axis=1)
            # bottom row (oh = +1): one vertical roll + one h-mask.
            bot = dwp[:, 6:7] * s_m1 + dwp[:, 7:8] * state + dwp[:, 8:9] * s_p1
            acc = acc + h_down * pltpu.roll(bot, shift=HW - W, axis=1)

            # dw BN scale already folded into the taps; just bias + ReLU.
            half = jnp.maximum(acc + dwp[:, 9:10], 0.0)

            # ---- 1x1 conv * pw BN scale, scattered into the concat rows -----
            pre = jnp.dot(pmat, half, preferred_element_type=jnp.float32)
            state = state + jnp.maximum(pre + dwp[:, 10:11], 0.0)

        o_ref[n] = state.astype(o_ref.dtype)


def _make_border_masks(H, W):
    """(4, H*W) 0/1 masks: left/right/up/down neighbour exists (pad=1 stencil)."""
    col = np.arange(H * W) % W
    row = np.arange(H * W) // W
    m = np.stack([
        col >= 1,          # ow = -1 valid
        col <= W - 2,      # ow = +1 valid
        row >= 1,          # oh = -1 valid
        row <= H - 2,      # oh = +1 valid
    ]).astype(np.float32)
    return jnp.asarray(m)


def _pick_batch_block(N):
    """Largest divisor of N giving <= 2 grid steps.

    Fewer, fatter grid steps amortize the ~0.35us per-step overhead on the
    single-TC v5e/v6e, while keeping >= 2 'parallel' blocks (when N >= 2) lets
    v7x shard the batch grid across its 2 TensorCores."""
    if N <= 1:
        return max(N, 1)
    target = (N + 1) // 2
    for nb in range(target, 0, -1):
        if N % nb == 0:
            return nb
    return 1


@jax.jit
def dense_block_pallas(x_nchw, packed):
    """DenseBlock forward. x_nchw: (N, C, H, W) f32 -> (N, 2C, H, W) f32."""
    N, C, H, W = x_nchw.shape
    Ct = 2 * C
    HW = H * W
    nb = _pick_batch_block(N)
    x_flat = x_nchw.reshape(N, C, HW)                 # contiguous, free
    masks = _make_border_masks(H, W)                  # tiny trace-time constant

    kernel = functools.partial(_dense_block_kernel, H=H, W=W)
    out = pl.pallas_call(
        kernel,
        out_shape=jax.ShapeDtypeStruct((N, Ct, HW), jnp.float32),
        grid_spec=pltpu.PrefetchScalarGridSpec(
            num_scalar_prefetch=0,
            grid=(N // nb,),
            in_specs=[
                pl.BlockSpec((nb, C, HW), lambda b: (b, 0, 0)),
                # dw / P / masks are grid-invariant and only a few KiB each.
                pl.BlockSpec(packed["dw"].shape, lambda b: (0, 0, 0)),
                pl.BlockSpec(packed["P"].shape, lambda b: (0, 0, 0)),
                pl.BlockSpec(masks.shape, lambda b: (0, 0)),
            ],
            out_specs=pl.BlockSpec((nb, Ct, HW), lambda b: (b, 0, 0)),
        ),
        compiler_params=pltpu.CompilerParams(
            dimension_semantics=("parallel",)),
    )(x_flat, packed["dw"], packed["P"], masks)
    return out.reshape(N, Ct, H, W)


# ----------------------------------------------------------------------------
# Parameter construction: raw params for the reference + packed kernel params.
# ----------------------------------------------------------------------------
def make_dense_block_params(key, channel_in, eps=1e-5):
    C = channel_in
    cout = C // 4
    Ct = 2 * C
    dw_all = np.zeros((4, Ct, 11), np.float32)        # taps*scale, dw bias, pw bias
    P_all = np.zeros((4, Ct, Ct), np.float32)
    raw = []
    keys = jax.random.split(key, 4)

    for u in range(4):
        cin = C + u * cout                            # also the output-row offset
        ks = jax.random.split(keys[u], 10)
        dw_w = 0.2 * jax.random.normal(ks[0], (3, 3, cin), jnp.float32)
        pw_w = 0.2 * jax.random.normal(ks[1], (cin, cout), jnp.float32)

        dw_gamma = 1.0 + 0.1 * jax.random.normal(ks[2], (cin,), jnp.float32)
        dw_beta = 0.1 * jax.random.normal(ks[3], (cin,), jnp.float32)
        dw_mean = 0.1 * jax.random.normal(ks[4], (cin,), jnp.float32)
        dw_var = 0.5 + jnp.abs(jax.random.normal(ks[5], (cin,), jnp.float32))

        pw_gamma = 1.0 + 0.1 * jax.random.normal(ks[6], (cout,), jnp.float32)
        pw_beta = 0.1 * jax.random.normal(ks[7], (cout,), jnp.float32)
        pw_mean = 0.1 * jax.random.normal(ks[8], (cout,), jnp.float32)
        pw_var = 0.5 + jnp.abs(jax.random.normal(ks[9], (cout,), jnp.float32))

        dw_scale = dw_gamma / jnp.sqrt(dw_var + eps)
        dw_bias = dw_beta - dw_mean * dw_scale
        pw_scale = pw_gamma / jnp.sqrt(pw_var + eps)
        pw_bias = pw_beta - pw_mean * pw_scale

        raw.append(dict(dw_w=dw_w, dw_scale=dw_scale, dw_bias=dw_bias,
                        pw_w=pw_w, pw_scale=pw_scale, pw_bias=pw_bias))

        # --- pack for the fused kernel ---------------------------------------
        # dw BN scale folded into the taps: scale*(sum w_k*tap_k) == sum (scale*w_k)*tap_k
        taps = np.asarray(dw_w).reshape(9, cin) * np.asarray(dw_scale)[None, :]
        dw_all[u, :cin, 0:9] = taps.T                 # (cin, 9)
        dw_all[u, :cin, 9] = np.asarray(dw_bias)
        dw_all[u, cin:cin + cout, 10] = np.asarray(pw_bias)
        # P[cin+oc, c] = pw_scale[oc] * pw_w[c, oc]  (zero elsewhere)
        P_all[u, cin:cin + cout, :cin] = (np.asarray(pw_scale)[:, None]
                                          * np.asarray(pw_w).T)

    packed = {"dw": jnp.asarray(dw_all), "P": jnp.asarray(P_all)}
    return packed, raw


# ----------------------------------------------------------------------------
# Pure-JAX reference (lax convs) for sanity checking.
# ----------------------------------------------------------------------------
def _mobile_unit_ref(x_nhwc, p):
    cin = x_nhwc.shape[-1]
    dw_rhs = p["dw_w"][:, :, None, :]                 # HWIO with I = 1 (grouped)
    y = lax.conv_general_dilated(
        x_nhwc, dw_rhs, window_strides=(1, 1), padding=((1, 1), (1, 1)),
        dimension_numbers=("NHWC", "HWIO", "NHWC"), feature_group_count=cin)
    y = jnp.maximum(y * p["dw_scale"] + p["dw_bias"], 0.0)
    pw_rhs = p["pw_w"][None, None, :, :]
    z = lax.conv_general_dilated(
        y, pw_rhs, window_strides=(1, 1), padding="VALID",
        dimension_numbers=("NHWC", "HWIO", "NHWC"))
    return jnp.maximum(z * p["pw_scale"] + p["pw_bias"], 0.0)


def dense_block_ref(x_nchw, raw_params):
    x = jnp.transpose(x_nchw, (0, 2, 3, 1))
    comb = x
    for p in raw_params:
        out = _mobile_unit_ref(comb, p)
        comb = jnp.concatenate([comb, out], axis=-1)
    return jnp.transpose(comb, (0, 3, 1, 2))


# ----------------------------------------------------------------------------
if __name__ == "__main__":
    key = jax.random.PRNGKey(0)
    k_x, k_p = jax.random.split(key)

    N, C, H, W = 2, 8, 16, 16          # channel_in must be divisible by 4
    x = jax.random.normal(k_x, (N, C, H, W), jnp.float32)
    packed, raw = make_dense_block_params(k_p, C)

    out = dense_block_pallas(x, packed)
    out = jax.block_until_ready(out)
    assert out.shape == (N, 2 * C, H, W), out.shape

    ref = dense_block_ref(x, raw)
    max_err = float(jnp.max(jnp.abs(out - ref)))
    assert jnp.allclose(out, ref, atol=1e-4, rtol=1e-4), max_err

    print("KERNEL_OK")
</pallas_src>

<mosaic_0001>
module attributes {stable_mosaic.version = 11 : i64} {
  func.func @_dense_block_kernel(%arg0: i32, %arg1: memref<1x8x256xf32, #tpu.memory_space<vmem>>, %arg2: memref<4x16x11xf32, #tpu.memory_space<vmem>>, %arg3: memref<4x16x16xf32, #tpu.memory_space<vmem>>, %arg4: memref<4x256xf32, #tpu.memory_space<vmem>>, %arg5: memref<1x16x256xf32, #tpu.memory_space<vmem>>) attributes {dimension_semantics = [#tpu.dimension_semantics<parallel>], iteration_bounds = array<i64: 2>, scalar_prefetch = 0 : i64, scratch_operands = 0 : i64, tpu.core_type = #tpu.core_type<tc>, window_params = [{transform_indices = @transform_0, window_bounds = array<i64: 1, 8, 256>}, {pipeline_mode = #tpu.pipeline_mode<synchronous>, transform_indices = @transform_1, window_bounds = array<i64: 4, 16, 11>}, {pipeline_mode = #tpu.pipeline_mode<synchronous>, transform_indices = @transform_2, window_bounds = array<i64: 4, 16, 16>}, {pipeline_mode = #tpu.pipeline_mode<synchronous>, transform_indices = @transform_3, window_bounds = array<i64: 4, 256>}, {transform_indices = @transform_4, window_bounds = array<i64: 1, 16, 256>}]} {
    %c0 = arith.constant 0 : index
    %c0_0 = arith.constant 0 : index
    %0 = vector.load %arg4[%c0, %c0_0] : memref<4x256xf32, #tpu.memory_space<vmem>>, vector<1x256xf32>
    %c1 = arith.constant 1 : index
    %c0_1 = arith.constant 0 : index
    %1 = vector.load %arg4[%c1, %c0_1] : memref<4x256xf32, #tpu.memory_space<vmem>>, vector<1x256xf32>
    %c2 = arith.constant 2 : index
    %c0_2 = arith.constant 0 : index
    %2 = vector.load %arg4[%c2, %c0_2] : memref<4x256xf32, #tpu.memory_space<vmem>>, vector<1x256xf32>
    %c3 = arith.constant 3 : index
    %c0_3 = arith.constant 0 : index
    %3 = vector.load %arg4[%c3, %c0_3] : memref<4x256xf32, #tpu.memory_space<vmem>>, vector<1x256xf32>
    %c0_4 = arith.constant 0 : index
    %c0_5 = arith.constant 0 : index
    %c0_6 = arith.constant 0 : index
    %4 = vector.load %arg1[%c0_4, %c0_5, %c0_6] : memref<1x8x256xf32, #tpu.memory_space<vmem>>, vector<1x8x256xf32>
    %5 = vector.shape_cast %4 : vector<1x8x256xf32> to vector<8x256xf32>
    %cst = arith.constant 0.000000e+00 : f32
    %6 = vector.broadcast %cst : f32 to vector<8x256xf32>
    %7 = tpu.concatenate %5, %6 in 0 : vector<8x256xf32>, vector<8x256xf32> -> vector<16x256xf32>
    %c0_7 = arith.constant 0 : index
    %c0_8 = arith.constant 0 : index
    %c0_9 = arith.constant 0 : index
    %8 = vector.load %arg2[%c0_7, %c0_8, %c0_9] : memref<4x16x11xf32, #tpu.memory_space<vmem>>, vector<1x16x11xf32>
    %9 = vector.shape_cast %8 : vector<1x16x11xf32> to vector<16x11xf32>
    %c0_10 = arith.constant 0 : index
    %c0_11 = arith.constant 0 : index
    %c0_12 = arith.constant 0 : index
    %10 = vector.load %arg3[%c0_10, %c0_11, %c0_12] : memref<4x16x16xf32, #tpu.memory_space<vmem>>, vector<1x16x16xf32>
    %11 = vector.shape_cast %10 : vector<1x16x16xf32> to vector<16x16xf32>
    %c1_i32 = arith.constant 1 : i32
    %12 = tpu.dynamic_rotate %7 by %c1_i32 dim 1 : vector<16x256xf32>, i32 -> vector<16x256xf32>
    %13 = vector.broadcast %0 : vector<1x256xf32> to vector<16x256xf32>
    %14 = arith.mulf %12, %13 : vector<16x256xf32>
    %c255_i32 = arith.constant 255 : i32
    %15 = tpu.dynamic_rotate %7 by %c255_i32 dim 1 : vector<16x256xf32>, i32 -> vector<16x256xf32>
    %16 = vector.broadcast %1 : vector<1x256xf32> to vector<16x256xf32>
    %17 = arith.mulf %15, %16 : vector<16x256xf32>
    %18 = vector.extract_strided_slice %9 {offsets = [0, 3], sizes = [16, 1], strides = [1, 1]} : vector<16x11xf32> to vector<16x1xf32>
    %19 = vector.broadcast %18 : vector<16x1xf32> to vector<16x256xf32>
    %20 = arith.mulf %19, %14 : vector<16x256xf32>
    %21 = vector.extract_strided_slice %9 {offsets = [0, 4], sizes = [16, 1], strides = [1, 1]} : vector<16x11xf32> to vector<16x1xf32>
    %22 = vector.broadcast %21 : vector<16x1xf32> to vector<16x256xf32>
    %23 = arith.mulf %22, %7 : vector<16x256xf32>
    %24 = arith.addf %20, %23 : vector<16x256xf32>
    %25 = vector.extract_strided_slice %9 {offsets = [0, 5], sizes = [16, 1], strides = [1, 1]} : vector<16x11xf32> to vector<16x1xf32>
    %26 = vector.broadcast %25 : vector<16x1xf32> to vector<16x256xf32>
    %27 = arith.mulf %26, %17 : vector<16x256xf32>
    %28 = arith.addf %24, %27 : vector<16x256xf32>
    %29 = vector.extract_strided_slice %9 {offsets = [0, 0], sizes = [16, 1], strides = [1, 1]} : vector<16x11xf32> to vector<16x1xf32>
    %30 = vector.broadcast %29 : vector<16x1xf32> to vector<16x256xf32>
    %31 = arith.mulf %30, %14 : vector<16x256xf32>
    %32 = vector.extract_strided_slice %9 {offsets = [0, 1], sizes = [16, 1], strides = [1, 1]} : vector<16x11xf32> to vector<16x1xf32>
    %33 = vector.broadcast %32 : vector<16x1xf32> to vector<16x256xf32>
    %34 = arith.mulf %33, %7 : vector<16x256xf32>
    %35 = arith.addf %31, %34 : vector<16x256xf32>
    %36 = vector.extract_strided_slice %9 {offsets = [0, 2], sizes = [16, 1], strides = [1, 1]} : vector<16x11xf32> to vector<16x1xf32>
    %37 = vector.broadcast %36 : vector<16x1xf32> to vector<16x256xf32>
    %38 = arith.mulf %37, %17 : vector<16x256xf32>
    %39 = arith.addf %35, %38 : vector<16x256xf32>
    %c16_i32 = arith.constant 16 : i32
    %40 = tpu.dynamic_rotate %39 by %c16_i32 dim 1 : vector<16x256xf32>, i32 -> vector<16x256xf32>
    %41 = vector.broadcast %2 : vector<1x256xf32> to vector<16x256xf32>
    %42 = arith.mulf %41, %40 : vector<16x256xf32>
    %43 = arith.addf %28, %42 : vector<16x256xf32>
    %44 = vector.extract_strided_slice %9 {offsets = [0, 6], sizes = [16, 1], strides = [1, 1]} : vector<16x11xf32> to vector<16x1xf32>
    %45 = vector.broadcast %44 : vector<16x1xf32> to vector<16x256xf32>
    %46 = arith.mulf %45, %14 : vector<16x256xf32>
    %47 = vector.extract_strided_slice %9 {offsets = [0, 7], sizes = [16, 1], strides = [1, 1]} : vector<16x11xf32> to vector<16x1xf32>
    %48 = vector.broadcast %47 : vector<16x1xf32> to vector<16x256xf32>
    %49 = arith.mulf %48, %7 : vector<16x256xf32>
    %50 = arith.addf %46, %49 : vector<16x256xf32>
    %51 = vector.extract_strided_slice %9 {offsets = [0, 8], sizes = [16, 1], strides = [1, 1]} : vector<16x11xf32> to vector<16x1xf32>
    %52 = vector.broadcast %51 : vector<16x1xf32> to vector<16x256xf32>
    %53 = arith.mulf %52, %17 : vector<16x256xf32>
    %54 = arith.addf %50, %53 : vector<16x256xf32>
    %c240_i32 = arith.constant 240 : i32
    %55 = tpu.dynamic_rotate %54 by %c240_i32 dim 1 : vector<16x256xf32>, i32 -> vector<16x256xf32>
    %56 = vector.broadcast %3 : vector<1x256xf32> to vector<16x256xf32>
    %57 = arith.mulf %56, %55 : vector<16x256xf32>
    %58 = arith.addf %43, %57 : vector<16x256xf32>
    %59 = vector.extract_strided_slice %9 {offsets = [0, 9], sizes = [16, 1], strides = [1, 1]} : vector<16x11xf32> to vector<16x1xf32>
    %60 = vector.broadcast %59 : vector<16x1xf32> to vector<16x256xf32>
    %61 = arith.addf %58, %60 : vector<16x256xf32>
    %cst_13 = arith.constant 0.000000e+00 : f32
    %62 = vector.broadcast %cst_13 : f32 to vector<16x256xf32>
    %63 = arith.maximumf %61, %62 : vector<16x256xf32>
    %cst_14 = arith.constant dense<0.000000e+00> : vector<16x256xf32>
    %64 = tpu.matmul %11, %63, %cst_14 {dimension_numbers = #tpu.dot_dimension_numbers<[1], [0], [0], [1], [0, 0, 1, 1], [], []>} : vector<16x16xf32>, vector<16x256xf32>, vector<16x256xf32> -> vector<16x256xf32>
    %65 = vector.extract_strided_slice %9 {offsets = [0, 10], sizes = [16, 1], strides = [1, 1]} : vector<16x11xf32> to vector<16x1xf32>
    %66 = vector.broadcast %65 : vector<16x1xf32> to vector<16x256xf32>
    %67 = arith.addf %64, %66 : vector<16x256xf32>
    %cst_15 = arith.constant 0.000000e+00 : f32
    %68 = vector.broadcast %cst_15 : f32 to vector<16x256xf32>
    %69 = arith.maximumf %67, %68 : vector<16x256xf32>
    %70 = arith.addf %7, %69 : vector<16x256xf32>
    %c1_16 = arith.constant 1 : index
    %c0_17 = arith.constant 0 : index
    %c0_18 = arith.constant 0 : index
    %71 = vector.load %arg2[%c1_16, %c0_17, %c0_18] : memref<4x16x11xf32, #tpu.memory_space<vmem>>, vector<1x16x11xf32>
    %72 = vector.shape_cast %71 : vector<1x16x11xf32> to vector<16x11xf32>
    %c1_19 = arith.constant 1 : index
    %c0_20 = arith.constant 0 : index
    %c0_21 = arith.constant 0 : index
    %73 = vector.load %arg3[%c1_19, %c0_20, %c0_21] : memref<4x16x16xf32, #tpu.memory_space<vmem>>, vector<1x16x16xf32>
    %74 = vector.shape_cast %73 : vector<1x16x16xf32> to vector<16x16xf32>
    %c1_i32_22 = arith.constant 1 : i32
    %75 = tpu.dynamic_rotate %70 by %c1_i32_22 dim 1 : vector<16x256xf32>, i32 -> vector<16x256xf32>
    %76 = vector.broadcast %0 : vector<1x256xf32> to vector<16x256xf32>
    %77 = arith.mulf %75, %76 : vector<16x256xf32>
    %c255_i32_23 = arith.constant 255 : i32
    %78 = tpu.dynamic_rotate %70 by %c255_i32_23 dim 1 : vector<16x256xf32>, i32 -> vector<16x256xf32>
    %79 = vector.broadcast %1 : vector<1x256xf32> to vector<16x256xf32>
    %80 = arith.mulf %78, %79 : vector<16x256xf32>
    %81 = vector.extract_strided_slice %72 {offsets = [0, 3], sizes = [16, 1], strides = [1, 1]} : vector<16x11xf32> to vector<16x1xf32>
    %82 = vector.broadcast %81 : vector<16x1xf32> to vector<16x256xf32>
    %83 = arith.mulf %82, %77 : vector<16x256xf32>
    %84 = vector.extract_strided_slice %72 {offsets = [0, 4], sizes = [16, 1], strides = [1, 1]} : vector<16x11xf32> to vector<16x1xf32>
    %85 = vector.broadcast %84 : vector<16x1xf32> to vector<16x256xf32>
    %86 = arith.mulf %85, %70 : vector<16x256xf32>
    %87 = arith.addf %83, %86 : vector<16x256xf32>
    %88 = vector.extract_strided_slice %72 {offsets = [0, 5], sizes = [16, 1], strides = [1, 1]} : vector<16x11xf32> to vector<16x1xf32>
    %89 = vector.broadcast %88 : vector<16x1xf32> to vector<16x256xf32>
    %90 = arith.mulf %89, %80 : vector<16x256xf32>
    %91 = arith.addf %87, %90 : vector<16x256xf32>
    %92 = vector.extract_strided_slice %72 {offsets = [0, 0], sizes = [16, 1], strides = [1, 1]} : vector<16x11xf32> to vector<16x1xf32>
    %93 = vector.broadcast %92 : vector<16x1xf32> to vector<16x256xf32>
    %94 = arith.mulf %93, %77 : vector<16x256xf32>
    %95 = vector.extract_strided_slice %72 {offsets = [0, 1], sizes = [16, 1], strides = [1, 1]} : vector<16x11xf32> to vector<16x1xf32>
    %96 = vector.broadcast %95 : vector<16x1xf32> to vector<16x256xf32>
    %97 = arith.mulf %96, %70 : vector<16x256xf32>
    %98 = arith.addf %94, %97 : vector<16x256xf32>
    %99 = vector.extract_strided_slice %72 {offsets = [0, 2], sizes = [16, 1], strides = [1, 1]} : vector<16x11xf32> to vector<16x1xf32>
    %100 = vector.broadcast %99 : vector<16x1xf32> to vector<16x256xf32>
    %101 = arith.mulf %100, %80 : vector<16x256xf32>
    %102 = arith.addf %98, %101 : vector<16x256xf32>
    %c16_i32_24 = arith.constant 16 : i32
    %103 = tpu.dynamic_rotate %102 by %c16_i32_24 dim 1 : vector<16x256xf32>, i32 -> vector<16x256xf32>
    %104 = vector.broadcast %2 : vector<1x256xf32> to vector<16x256xf32>
    %105 = arith.mulf %104, %103 : vector<16x256xf32>
    %106 = arith.addf %91, %105 : vector<16x256xf32>
    %107 = vector.extract_strided_slice %72 {offsets = [0, 6], sizes = [16, 1], strides = [1, 1]} : vector<16x11xf32> to vector<16x1xf32>
    %108 = vector.broadcast %107 : vector<16x1xf32> to vector<16x256xf32>
    %109 = arith.mulf %108, %77 : vector<16x256xf32>
    %110 = vector.extract_strided_slice %72 {offsets = [0, 7], sizes = [16, 1], strides = [1, 1]} : vector<16x11xf32> to vector<16x1xf32>
    %111 = vector.broadcast %110 : vector<16x1xf32> to vector<16x256xf32>
    %112 = arith.mulf %111, %70 : vector<16x256xf32>
    %113 = arith.addf %109, %112 : vector<16x256xf32>
    %114 = vector.extract_strided_slice %72 {offsets = [0, 8], sizes = [16, 1], strides = [1, 1]} : vector<16x11xf32> to vector<16x1xf32>
    %115 = vector.broadcast %114 : vector<16x1xf32> to vector<16x256xf32>
    %116 = arith.mulf %115, %80 : vector<16x256xf32>
    %117 = arith.addf %113, %116 : vector<16x256xf32>
    %c240_i32_25 = arith.constant 240 : i32
    %118 = tpu.dynamic_rotate %117 by %c240_i32_25 dim 1 : vector<16x256xf32>, i32 -> vector<16x256xf32>
    %119 = vector.broadcast %3 : vector<1x256xf32> to vector<16x256xf32>
    %120 = arith.mulf %119, %118 : vector<16x256xf32>
    %121 = arith.addf %106, %120 : vector<16x256xf32>
    %122 = vector.extract_strided_slice %72 {offsets = [0, 9], sizes = [16, 1], strides = [1, 1]} : vector<16x11xf32> to vector<16x1xf32>
    %123 = vector.broadcast %122 : vector<16x1xf32> to vector<16x256xf32>
    %124 = arith.addf %121, %123 : vector<16x256xf32>
    %cst_26 = arith.constant 0.000000e+00 : f32
    %125 = vector.broadcast %cst_26 : f32 to vector<16x256xf32>
    %126 = arith.maximumf %124, %125 : vector<16x256xf32>
    %cst_27 = arith.constant dense<0.000000e+00> : vector<16x256xf32>
    %127 = tpu.matmul %74, %126, %cst_27 {dimension_numbers = #tpu.dot_dimension_numbers<[1], [0], [0], [1], [0, 0, 1, 1], [], []>} : vector<16x16xf32>, vector<16x256xf32>, vector<16x256xf32> -> vector<16x256xf32>
    %128 = vector.extract_strided_slice %72 {offsets = [0, 10], sizes = [16, 1], strides = [1, 1]} : vector<16x11xf32> to vector<16x1xf32>
    %129 = vector.broadcast %128 : vector<16x1xf32> to vector<16x256xf32>
    %130 = arith.addf %127, %129 : vector<16x256xf32>
    %cst_28 = arith.constant 0.000000e+00 : f32
    %131 = vector.broadcast %cst_28 : f32 to vector<16x256xf32>
    %132 = arith.maximumf %130, %131 : vector<16x256xf32>
    %133 = arith.addf %70, %132 : vector<16x256xf32>
    %c2_29 = arith.constant 2 : index
    %c0_30 = arith.constant 0 : index
    %c0_31 = arith.constant 0 : index
    %134 = vector.load %arg2[%c2_29, %c0_30, %c0_31] : memref<4x16x11xf32, #tpu.memory_space<vmem>>, vector<1x16x11xf32>
    %135 = vector.shape_cast %134 : vector<1x16x11xf32> to vector<16x11xf32>
    %c2_32 = arith.constant 2 : index
    %c0_33 = arith.constant 0 : index
    %c0_34 = arith.constant 0 : index
    %136 = vector.load %arg3[%c2_32, %c0_33, %c0_34] : memref<4x16x16xf32, #tpu.memory_space<vmem>>, vector<1x16x16xf32>
    %137 = vector.shape_cast %136 : vector<1x16x16xf32> to vector<16x16xf32>
    %c1_i32_35 = arith.constant 1 : i32
    %138 = tpu.dynamic_rotate %133 by %c1_i32_35 dim 1 : vector<16x256xf32>, i32 -> vector<16x256xf32>
    %139 = vector.broadcast %0 : vector<1x256xf32> to vector<16x256xf32>
    %140 = arith.mulf %138, %139 : vector<16x256xf32>
    %c255_i32_36 = arith.constant 255 : i32
    %141 = tpu.dynamic_rotate %133 by %c255_i32_36 dim 1 : vector<16x256xf32>, i32 -> vector<16x256xf32>
    %142 = vector.broadcast %1 : vector<1x256xf32> to vector<16x256xf32>
    %143 = arith.mulf %141, %142 : vector<16x256xf32>
    %144 = vector.extract_strided_slice %135 {offsets = [0, 3], sizes = [16, 1], strides = [1, 1]} : vector<16x11xf32> to vector<16x1xf32>
    %145 = vector.broadcast %144 : vector<16x1xf32> to vector<16x256xf32>
    %146 = arith.mulf %145, %140 : vector<16x256xf32>
    %147 = vector.extract_strided_slice %135 {offsets = [0, 4], sizes = [16, 1], strides = [1, 1]} : vector<16x11xf32> to vector<16x1xf32>
    %148 = vector.broadcast %147 : vector<16x1xf32> to vector<16x256xf32>
    %149 = arith.mulf %148, %133 : vector<16x256xf32>
    %150 = arith.addf %146, %149 : vector<16x256xf32>
    %151 = vector.extract_strided_slice %135 {offsets = [0, 5], sizes = [16, 1], strides = [1, 1]} : vector<16x11xf32> to vector<16x1xf32>
    %152 = vector.broadcast %151 : vector<16x1xf32> to vector<16x256xf32>
    %153 = arith.mulf %152, %143 : vector<16x256xf32>
    %154 = arith.addf %150, %153 : vector<16x256xf32>
    %155 = vector.extract_strided_slice %135 {offsets = [0, 0], sizes = [16, 1], strides = [1, 1]} : vector<16x11xf32> to vector<16x1xf32>
    %156 = vector.broadcast %155 : vector<16x1xf32> to vector<16x256xf32>
    %157 = arith.mulf %156, %140 : vector<16x256xf32>
    %158 = vector.extract_strided_slice %135 {offsets = [0, 1], sizes = [16, 1], strides = [1, 1]} : vector<16x11xf32> to vector<16x1xf32>
    %159 = vector.broadcast %158 : vector<16x1xf32> to vector<16x256xf32>
    %160 = arith.mulf %159, %133 : vector<16x256xf32>
    %161 = arith.addf %157, %160 : vector<16x256xf32>
    %162 = vector.extract_strided_slice %135 {offsets = [0, 2], sizes = [16, 1], strides = [1, 1]} : vector<16x11xf32> to vector<16x1xf32>
    %163 = vector.broadcast %162 : vector<16x1xf32> to vector<16x256xf32>
    %164 = arith.mulf %163, %143 : vector<16x256xf32>
    %165 = arith.addf %161, %164 : vector<16x256xf32>
    %c16_i32_37 = arith.constant 16 : i32
    %166 = tpu.dynamic_rotate %165 by %c16_i32_37 dim 1 : vector<16x256xf32>, i32 -> vector<16x256xf32>
    %167 = vector.broadcast %2 : vector<1x256xf32> to vector<16x256xf32>
    %168 = arith.mulf %167, %166 : vector<16x256xf32>
    %169 = arith.addf %154, %168 : vector<16x256xf32>
    %170 = vector.extract_strided_slice %135 {offsets = [0, 6], sizes = [16, 1], strides = [1, 1]} : vector<16x11xf32> to vector<16x1xf32>
    %171 = vector.broadcast %170 : vector<16x1xf32> to vector<16x256xf32>
    %172 = arith.mulf %171, %140 : vector<16x256xf32>
    %173 = vector.extract_strided_slice %135 {offsets = [0, 7], sizes = [16, 1], strides = [1, 1]} : vector<16x11xf32> to vector<16x1xf32>
    %174 = vector.broadcast %173 : vector<16x1xf32> to vector<16x256xf32>
    %175 = arith.mulf %174, %133 : vector<16x256xf32>
    %176 = arith.addf %172, %175 : vector<16x256xf32>
    %177 = vector.extract_strided_slice %135 {offsets = [0, 8], sizes = [16, 1], strides = [1, 1]} : vector<16x11xf32> to vector<16x1xf32>
    %178 = vector.broadcast %177 : vector<16x1xf32> to vector<16x256xf32>
    %179 = arith.mulf %178, %143 : vector<16x256xf32>
    %180 = arith.addf %176, %179 : vector<16x256xf32>
    %c240_i32_38 = arith.constant 240 : i32
    %181 = tpu.dynamic_rotate %180 by %c240_i32_38 dim 1 : vector<16x256xf32>, i32 -> vector<16x256xf32>
    %182 = vector.broadcast %3 : vector<1x256xf32> to vector<16x256xf32>
    %183 = arith.mulf %182, %181 : vector<16x256xf32>
    %184 = arith.addf %169, %183 : vector<16x256xf32>
    %185 = vector.extract_strided_slice %135 {offsets = [0, 9], sizes = [16, 1], strides = [1, 1]} : vector<16x11xf32> to vector<16x1xf32>
    %186 = vector.broadcast %185 : vector<16x1xf32> to vector<16x256xf32>
    %187 = arith.addf %184, %186 : vector<16x256xf32>
    %cst_39 = arith.constant 0.000000e+00 : f32
    %188 = vector.broadcast %cst_39 : f32 to vector<16x256xf32>
    %189 = arith.maximumf %187, %188 : vector<16x256xf32>
    %cst_40 = arith.constant dense<0.000000e+00> : vector<16x256xf32>
    %190 = tpu.matmul %137, %189, %cst_40 {dimension_numbers = #tpu.dot_dimension_numbers<[1], [0], [0], [1], [0, 0, 1, 1], [], []>} : vector<16x16xf32>, vector<16x256xf32>, vector<16x256xf32> -> vector<16x256xf32>
    %191 = vector.extract_strided_slice %135 {offsets = [0, 10], sizes = [16, 1], strides = [1, 1]} : vector<16x11xf32> to vector<16x1xf32>
    %192 = vector.broadcast %191 : vector<16x1xf32> to vector<16x256xf32>
    %193 = arith.addf %190, %192 : vector<16x256xf32>
    %cst_41 = arith.constant 0.000000e+00 : f32
    %194 = vector.broadcast %cst_41 : f32 to vector<16x256xf32>
    %195 = arith.maximumf %193, %194 : vector<16x256xf32>
    %196 = arith.addf %133, %195 : vector<16x256xf32>
    %c3_42 = arith.constant 3 : index
    %c0_43 = arith.constant 0 : index
    %c0_44 = arith.constant 0 : index
    %197 = vector.load %arg2[%c3_42, %c0_43, %c0_44] : memref<4x16x11xf32, #tpu.memory_space<vmem>>, vector<1x16x11xf32>
    %198 = vector.shape_cast %197 : vector<1x16x11xf32> to vector<16x11xf32>
    %c3_45 = arith.constant 3 : index
    %c0_46 = arith.constant 0 : index
    %c0_47 = arith.constant 0 : index
    %199 = vector.load %arg3[%c3_45, %c0_46, %c0_47] : memref<4x16x16xf32, #tpu.memory_space<vmem>>, vector<1x16x16xf32>
    %200 = vector.shape_cast %199 : vector<1x16x16xf32> to vector<16x16xf32>
    %c1_i32_48 = arith.constant 1 : i32
    %201 = tpu.dynamic_rotate %196 by %c1_i32_48 dim 1 : vector<16x256xf32>, i32 -> vector<16x256xf32>
    %202 = vector.broadcast %0 : vector<1x256xf32> to vector<16x256xf32>
    %203 = arith.mulf %201, %202 : vector<16x256xf32>
    %c255_i32_49 = arith.constant 255 : i32
    %204 = tpu.dynamic_rotate %196 by %c255_i32_49 dim 1 : vector<16x256xf32>, i32 -> vector<16x256xf32>
    %205 = vector.broadcast %1 : vector<1x256xf32> to vector<16x256xf32>
    %206 = arith.mulf %204, %205 : vector<16x256xf32>
    %207 = vector.extract_strided_slice %198 {offsets = [0, 3], sizes = [16, 1], strides = [1, 1]} : vector<16x11xf32> to vector<16x1xf32>
    %208 = vector.broadcast %207 : vector<16x1xf32> to vector<16x256xf32>
    %209 = arith.mulf %208, %203 : vector<16x256xf32>
    %210 = vector.extract_strided_slice %198 {offsets = [0, 4], sizes = [16, 1], strides = [1, 1]} : vector<16x11xf32> to vector<16x1xf32>
    %211 = vector.broadcast %210 : vector<16x1xf32> to vector<16x256xf32>
    %212 = arith.mulf %211, %196 : vector<16x256xf32>
    %213 = arith.addf %209, %212 : vector<16x256xf32>
    %214 = vector.extract_strided_slice %198 {offsets = [0, 5], sizes = [16, 1], strides = [1, 1]} : vector<16x11xf32> to vector<16x1xf32>
    %215 = vector.broadcast %214 : vector<16x1xf32> to vector<16x256xf32>
    %216 = arith.mulf %215, %206 : vector<16x256xf32>
    %217 = arith.addf %213, %216 : vector<16x256xf32>
    %218 = vector.extract_strided_slice %198 {offsets = [0, 0], sizes = [16, 1], strides = [1, 1]} : vector<16x11xf32> to vector<16x1xf32>
    %219 = vector.broadcast %218 : vector<16x1xf32> to vector<16x256xf32>
    %220 = arith.mulf %219, %203 : vector<16x256xf32>
    %221 = vector.extract_strided_slice %198 {offsets = [0, 1], sizes = [16, 1], strides = [1, 1]} : vector<16x11xf32> to vector<16x1xf32>
    %222 = vector.broadcast %221 : vector<16x1xf32> to vector<16x256xf32>
    %223 = arith.mulf %222, %196 : vector<16x256xf32>
    %224 = arith.addf %220, %223 : vector<16x256xf32>
    %225 = vector.extract_strided_slice %198 {offsets = [0, 2], sizes = [16, 1], strides = [1, 1]} : vector<16x11xf32> to vector<16x1xf32>
    %226 = vector.broadcast %225 : vector<16x1xf32> to vector<16x256xf32>
    %227 = arith.mulf %226, %206 : vector<16x256xf32>
    %228 = arith.addf %224, %227 : vector<16x256xf32>
    %c16_i32_50 = arith.constant 16 : i32
    %229 = tpu.dynamic_rotate %228 by %c16_i32_50 dim 1 : vector<16x256xf32>, i32 -> vector<16x256xf32>
    %230 = vector.broadcast %2 : vector<1x256xf32> to vector<16x256xf32>
    %231 = arith.mulf %230, %229 : vector<16x256xf32>
    %232 = arith.addf %217, %231 : vector<16x256xf32>
    %233 = vector.extract_strided_slice %198 {offsets = [0, 6], sizes = [16, 1], strides = [1, 1]} : vector<16x11xf32> to vector<16x1xf32>
    %234 = vector.broadcast %233 : vector<16x1xf32> to vector<16x256xf32>
    %235 = arith.mulf %234, %203 : vector<16x256xf32>
    %236 = vector.extract_strided_slice %198 {offsets = [0, 7], sizes = [16, 1], strides = [1, 1]} : vector<16x11xf32> to vector<16x1xf32>
    %237 = vector.broadcast %236 : vector<16x1xf32> to vector<16x256xf32>
    %238 = arith.mulf %237, %196 : vector<16x256xf32>
    %239 = arith.addf %235, %238 : vector<16x256xf32>
    %240 = vector.extract_strided_slice %198 {offsets = [0, 8], sizes = [16, 1], strides = [1, 1]} : vector<16x11xf32> to vector<16x1xf32>
    %241 = vector.broadcast %240 : vector<16x1xf32> to vector<16x256xf32>
    %242 = arith.mulf %241, %206 : vector<16x256xf32>
    %243 = arith.addf %239, %242 : vector<16x256xf32>
    %c240_i32_51 = arith.constant 240 : i32
    %244 = tpu.dynamic_rotate %243 by %c240_i32_51 dim 1 : vector<16x256xf32>, i32 -> vector<16x256xf32>
    %245 = vector.broadcast %3 : vector<1x256xf32> to vector<16x256xf32>
    %246 = arith.mulf %245, %244 : vector<16x256xf32>
    %247 = arith.addf %232, %246 : vector<16x256xf32>
    %248 = vector.extract_strided_slice %198 {offsets = [0, 9], sizes = [16, 1], strides = [1, 1]} : vector<16x11xf32> to vector<16x1xf32>
    %249 = vector.broadcast %248 : vector<16x1xf32> to vector<16x256xf32>
    %250 = arith.addf %247, %249 : vector<16x256xf32>
    %cst_52 = arith.constant 0.000000e+00 : f32
    %251 = vector.broadcast %cst_52 : f32 to vector<16x256xf32>
    %252 = arith.maximumf %250, %251 : vector<16x256xf32>
    %cst_53 = arith.constant dense<0.000000e+00> : vector<16x256xf32>
    %253 = tpu.matmul %200, %252, %cst_53 {dimension_numbers = #tpu.dot_dimension_numbers<[1], [0], [0], [1], [0, 0, 1, 1], [], []>} : vector<16x16xf32>, vector<16x256xf32>, vector<16x256xf32> -> vector<16x256xf32>
    %254 = vector.extract_strided_slice %198 {offsets = [0, 10], sizes = [16, 1], strides = [1, 1]} : vector<16x11xf32> to vector<16x1xf32>
    %255 = vector.broadcast %254 : vector<16x1xf32> to vector<16x256xf32>
    %256 = arith.addf %253, %255 : vector<16x256xf32>
    %cst_54 = arith.constant 0.000000e+00 : f32
    %257 = vector.broadcast %cst_54 : f32 to vector<16x256xf32>
    %258 = arith.maximumf %256, %257 : vector<16x256xf32>
    %259 = arith.addf %196, %258 : vector<16x256xf32>
    %c0_55 = arith.constant 0 : index
    %c0_56 = arith.constant 0 : index
    %c0_57 = arith.constant 0 : index
    %260 = vector.load %arg5[%c0_55, %c0_56, %c0_57] : memref<1x16x256xf32, #tpu.memory_space<vmem>>, vector<1x16x256xf32>
    %261 = vector.shape_cast %260 : vector<1x16x256xf32> to vector<16x256xf32>
    %262 = vector.shape_cast %259 : vector<16x256xf32> to vector<1x16x256xf32>
    tpu.vector_store %arg5[%c0_55, %c0_56, %c0_57], %262 {strides = array<i32>} : memref<1x16x256xf32, #tpu.memory_space<vmem>>, vector<1x16x256xf32>,
    return
  }
  func.func @transform_0(%arg0: i32) -> (i32, i32, i32) {
    %c0_i32 = arith.constant 0 : i32
    %c0_i32_0 = arith.constant 0 : i32
    %c0_i32_1 = arith.constant 0 : i32
    return %arg0, %c0_i32, %c0_i32_0 : i32, i32, i32
  }
  func.func @transform_1(%arg0: i32) -> (i32, i32, i32) {
    %c0_i32 = arith.constant 0 : i32
    %c0_i32_0 = arith.constant 0 : i32
    %c0_i32_1 = arith.constant 0 : i32
    %c0_i32_2 = arith.constant 0 : i32
    return %c0_i32, %c0_i32_0, %c0_i32_1 : i32, i32, i32
  }
  func.func @transform_2(%arg0: i32) -> (i32, i32, i32) {
    %c0_i32 = arith.constant 0 : i32
    %c0_i32_0 = arith.constant 0 : i32
    %c0_i32_1 = arith.constant 0 : i32
    %c0_i32_2 = arith.constant 0 : i32
    return %c0_i32, %c0_i32_0, %c0_i32_1 : i32, i32, i32
  }
  func.func @transform_3(%arg0: i32) -> (i32, i32) {
    %c0_i32 = arith.constant 0 : i32
    %c0_i32_0 = arith.constant 0 : i32
    %c0_i32_1 = arith.constant 0 : i32
    return %c0_i32, %c0_i32_0 : i32, i32
  }
  func.func @transform_4(%arg0: i32) -> (i32, i32, i32) {
    %c0_i32 = arith.constant 0 : i32
    %c0_i32_0 = arith.constant 0 : i32
    %c0_i32_1 = arith.constant 0 : i32
    return %arg0, %c0_i32, %c0_i32_0 : i32, i32, i32
  }
}

</mosaic_0001>

<llo_original>
// kernel: dense_block_pallas.1
$region0: #{dense_block_pallas.1}
  #allocation0 [shape = 'u32[]', space=smem, size = 0x4, offset = 0x4, fixed_abs, tag = 'smem constant byte address 0x4 - core index']
  #allocation1 [shape = 'u32[144,128]{1,0:T(1,128)}', space=vmem, size = 0x12000, scoped, tag = 'internal scratch']
  %s0 = inlined_call_operand.vmem [shape: f32[2,8,256], index: 0, kind: input, shape index: {}]
  %s1 = inlined_call_operand.vmem [shape: f32[4,16,11], index: 1, kind: input, shape index: {}]
  %s2 = inlined_call_operand.vmem [shape: f32[4,16,16], index: 2, kind: input, shape index: {}]
  %s3 = inlined_call_operand.vmem [shape: f32[4,256], index: 3, kind: input, shape index: {}]
  %s4 = inlined_call_operand.vmem [shape: f32[2,16,256], index: 4, kind: output, shape index: {}]
  %s5 = sld [smem:[#allocation0]]
  $region49: #{dense_block_pallas.1} parent=0
    _
  %s7 = ssub.s32 1, %s5
  %s8 = scalar_select 0, %s7, %s5
  loop: start=0, step=1, limit=4
  $region2: #{dense_block_pallas.1} parent=0 // loop_pre_header
    _
  $region3: #{dense_block_pallas.1} parent=0 // loop_header
    %s10 = sphi 0, %s14
    %p11 = scmp.ge.s32.totalorder %s10, 4
    %s20 = sphi 0, %s22
    %s23 = sphi 0, %s20
    %s24 = sphi 0, %s23
    %s40 = sphi 0, %s24
    %s44 = sphi 0, %s44
    %s46 = sphi 0, %s44
    %s47 = sphi 0, %s46
    %s61 = sphi 0, %s47
    %s65 = sphi 0, %s65
    %s67 = sphi 0, %s65
    %s68 = sphi 0, %s67
    %s82 = sphi 0, %s68
    %s86 = sphi 0, %s86
    %s88 = sphi 0, %s86
    %s89 = sphi 0, %s88
    %s103 = sphi 0, %s89
    %s109 = sphi 0, %s111
    %s112 = sphi 0, %s109
    %s113 = sphi 0, %s112
    %s129 = sphi 0, %s113
  $region4: #{dense_block_pallas.1} parent=0 // loop_header_branch
    %13 = sbr.rel (%p11) target = $region8
  $region5: #{dense_block_pallas.1} parent=0 // loop_body
    %s15 = ssub.s32 %s10, 1
    %s16 = ssub.s32 %s10, 2
    %s17 = sadd.s32 %s10, 1
    %s18 = ssub.s32 %s10, %s17
    %p19 = scmp.eq.s32.totalorder %s18, 0
    %s21 = sadd.s32 %s20, 1
    %s22 = scalar_select %p19, %s20, %s21
    %p25 = pneg %p19
    %p26 = scmp.eq.s32.totalorder %s10, 1
    %p27 = por %p25, %p26
    %p28 = scmp.ne.s32.totalorder %s20, %s23
    %p29 = scmp.eq.s32.totalorder %s10, 0
    %p30 = por %p28, %p29
    %p31 = scmp.ne.s32.totalorder %s20, %s23
    %p32 = scmp.eq.s32.totalorder %s15, 1
    %p33 = por %p31, %p32
    %p34 = scmp.ne.s32.totalorder %s23, %s24
    %p35 = scmp.eq.s32.totalorder %s15, 0
    %p36 = por %p34, %p35
    %p37 = scmp.ne.s32.totalorder %s23, %s24
    %p38 = scmp.eq.s32.totalorder %s16, 1
    %p39 = por %p37, %p38
    %p41 = scmp.ne.s32.totalorder %s24, %s40
    %p42 = scmp.eq.s32.totalorder %s16, 0
    %p43 = por %p41, %p42
    %s45 = sadd.s32 %s44, 1
    %p48 = scmp.eq.s32.totalorder %s10, 1
    %p49 = scmp.ne.s32.totalorder %s44, %s46
    %p50 = scmp.eq.s32.totalorder %s10, 0
    %p51 = por %p49, %p50
    %p52 = scmp.ne.s32.totalorder %s44, %s46
    %p53 = scmp.eq.s32.totalorder %s15, 1
    %p54 = por %p52, %p53
    %p55 = scmp.ne.s32.totalorder %s46, %s47
    %p56 = scmp.eq.s32.totalorder %s15, 0
    %p57 = por %p55, %p56
    %p58 = scmp.ne.s32.totalorder %s46, %s47
    %p59 = scmp.eq.s32.totalorder %s16, 1
    %p60 = por %p58, %p59
    %p62 = scmp.ne.s32.totalorder %s47, %s61
    %p63 = scmp.eq.s32.totalorder %s16, 0
    %p64 = por %p62, %p63
    %s66 = sadd.s32 %s65, 1
    %p69 = scmp.eq.s32.totalorder %s10, 1
    %p70 = scmp.ne.s32.totalorder %s65, %s67
    %p71 = scmp.eq.s32.totalorder %s10, 0
    %p72 = por %p70, %p71
    %p73 = scmp.ne.s32.totalorder %s65, %s67
    %p74 = scmp.eq.s32.totalorder %s15, 1
    %p75 = por %p73, %p74
    %p76 = scmp.ne.s32.totalorder %s67, %s68
    %p77 = scmp.eq.s32.totalorder %s15, 0
    %p78 = por %p76, %p77
    %p79 = scmp.ne.s32.totalorder %s67, %s68
    %p80 = scmp.eq.s32.totalorder %s16, 1
    %p81 = por %p79, %p80
    %p83 = scmp.ne.s32.totalorder %s68, %s82
    %p84 = scmp.eq.s32.totalorder %s16, 0
    %p85 = por %p83, %p84
    %s87 = sadd.s32 %s86, 1
    %p90 = scmp.eq.s32.totalorder %s10, 1
    %p91 = scmp.ne.s32.totalorder %s86, %s88
    %p92 = scmp.eq.s32.totalorder %s10, 0
    %p93 = por %p91, %p92
    %p94 = scmp.ne.s32.totalorder %s86, %s88
    %p95 = scmp.eq.s32.totalorder %s15, 1
    %p96 = por %p94, %p95
    %p97 = scmp.ne.s32.totalorder %s88, %s89
    %p98 = scmp.eq.s32.totalorder %s15, 0
    %p99 = por %p97, %p98
    %p100 = scmp.ne.s32.totalorder %s88, %s89
    %p101 = scmp.eq.s32.totalorder %s16, 1
    %p102 = por %p100, %p101
    %p104 = scmp.ne.s32.totalorder %s89, %s103
    %p105 = scmp.eq.s32.totalorder %s16, 0
    %p106 = por %p104, %p105
    %s107 = ssub.s32 %s10, %s17
    %p108 = scmp.eq.s32.totalorder %s107, 0
    %s110 = sadd.s32 %s109, 1
    %s111 = scalar_select %p108, %s109, %s110
    %p114 = pneg %p108
    %p115 = scmp.eq.s32.totalorder %s10, 1
    %p116 = por %p114, %p115
    %p117 = scmp.ne.s32.totalorder %s109, %s112
    %p118 = scmp.eq.s32.totalorder %s10, 0
    %p119 = por %p117, %p118
    %p120 = scmp.ne.s32.totalorder %s109, %s112
    %p121 = scmp.eq.s32.totalorder %s15, 1
    %p122 = por %p120, %p121
    %p123 = scmp.ne.s32.totalorder %s112, %s113
    %p124 = scmp.eq.s32.totalorder %s15, 0
    %p125 = por %p123, %p124
    %p126 = scmp.ne.s32.totalorder %s112, %s113
    %p127 = scmp.eq.s32.totalorder %s16, 1
    %p128 = por %p126, %p127
    %p130 = scmp.ne.s32.totalorder %s113, %s129
    %p131 = scmp.eq.s32.totalorder %s16, 0
    %p132 = por %p130, %p131
    %p133 = scmp.le.s32.totalorder 1, %s10
    %p134 = scmp.lt.s32.totalorder %s10, 3
    %p135 = pnand %p133, %p134
    %p136 = pneg %p135
    // Predicated region
    $region9: #{dense_block_pallas.1} parent=5 // pred_check
      _
    $region10: #{dense_block_pallas.1} parent=5 // pred_check_branch
      %138 = sbr.rel (%p135) target = $region12
    $region11: #{dense_block_pallas.1} parent=5 // pred_region
      %s139 = ssub.s32 %s10, 1
      // Predicated region
      $region13: #{dense_block_pallas.1} parent=11 // pred_check
        %p140 = pneg %p57
      $region14: #{dense_block_pallas.1} parent=11 // pred_check_branch
        %142 = sbr.rel (%p140) target = $region16
      $region15: #{dense_block_pallas.1} parent=11 // pred_region
        _
      $region16: #{dense_block_pallas.1} parent=11 // pred_fallthru
        _
      // Predicated region
      $region17: #{dense_block_pallas.1} parent=11 // pred_check
        %p143 = pneg %p78
      $region18: #{dense_block_pallas.1} parent=11 // pred_check_branch
        %145 = sbr.rel (%p143) target = $region20
      $region19: #{dense_block_pallas.1} parent=11 // pred_region
        _
      $region20: #{dense_block_pallas.1} parent=11 // pred_fallthru
        _
      // Predicated region
      $region21: #{dense_block_pallas.1} parent=11 // pred_check
        %p146 = pneg %p99
      $region22: #{dense_block_pallas.1} parent=11 // pred_check_branch
        %148 = sbr.rel (%p146) target = $region24
      $region23: #{dense_block_pallas.1} parent=11 // pred_region
        _
      $region24: #{dense_block_pallas.1} parent=11 // pred_fallthru
        _
    $region12: #{dense_block_pallas.1} parent=5 // pred_fallthru
      _
    %p149 = scmp.lt.s32.totalorder %s10, 2
    // Predicated region
    $region25: #{dense_block_pallas.1} parent=5 // pred_check
      %p150 = pneg %p149
    $region26: #{dense_block_pallas.1} parent=5 // pred_check_branch
      %152 = sbr.rel (%p150) target = $region28
    $region27: #{dense_block_pallas.1} parent=5 // pred_region
      // Predicated region
      $region29: #{dense_block_pallas.1} parent=27 // pred_check
        %p153 = pneg %p30
      $region30: #{dense_block_pallas.1} parent=27 // pred_check_branch
        %155 = sbr.rel (%p153) target = $region32
      $region31: #{dense_block_pallas.1} parent=27 // pred_region
        %p156 = scmp.lt.s32.totalorder %s10, 1
        %s157 = scalar_select %p156, %s10, 1
        %s158 = smul.addr %s157, 2
        %s159 = smul.addr %s158, 8
        %s160 = scalar_lea.vmem %s0, %s159
      $region32: #{dense_block_pallas.1} parent=27 // pred_fallthru
        _
    $region28: #{dense_block_pallas.1} parent=5 // pred_fallthru
      _
    %p161 = scmp.le.s32.totalorder 1, %s10
    %p162 = scmp.lt.s32.totalorder %s10, 3
    %p163 = pnand %p161, %p162
    %p164 = pneg %p163
    // Predicated region
    $region33: #{dense_block_pallas.1} parent=5 // pred_check
      _
    $region34: #{dense_block_pallas.1} parent=5 // pred_check_branch
      %166 = sbr.rel (%p163) target = $region36
    $region35: #{dense_block_pallas.1} parent=5 // pred_region
      %s167 = ssub.s32 %s10, 1
      %p168 = scmp.lt.s32.totalorder %s15, 1
      %s169 = scalar_select %p168, %s15, 1
      %s170 = smul.addr %s169, 2
      %s171 = smul.addr %s170, 8
      %s172 = scalar_lea.vmem %s0, %s171
      %p173 = pneg %p36
      %p174 = pneg %p33
      %p175 = pneg %p57
      %p176 = pneg %p54
      %p177 = pneg %p78
      %p178 = pneg %p75
      %p179 = pneg %p99
      %p180 = pneg %p96
      %p181 = pneg %p125
      %p182 = pneg %p122
      %p183 = scmp.lt.s32.totalorder %s15, 1
      %s184 = scalar_select %p183, %s15, 1
      %s185 = smul.addr %s184, 4
      %s186 = smul.addr %s185, 8
      %s187 = scalar_lea.vmem %s4, %s186
      %p188 = scmp.lt.s32.totalorder %s15, 1
      %s189 = scalar_select %p188, %s15, 1
      %s190 = smul.addr %s189, 2
      %s191 = smul.addr %s190, 8
      %s192 = scalar_lea.vmem %s0, %s191
      %p193 = scmp.lt.s32.totalorder %s15, 1
      %s194 = scalar_select %p193, %s15, 1
      %s195 = smul.addr %s194, 4
      %s196 = smul.addr %s195, 8
      %s197 = scalar_lea.vmem %s4, %s196
      %v198 = vld [vmem:[%s3] ss:$4 sm:$0x3]
      %s199 = scalar_lea.vmem %s3, 1
      %v200 = vld [vmem:[%s199] ss:$4 sm:$0x3]
      %s201 = scalar_lea.vmem %s3, 2
      %v202 = vld [vmem:[%s201] ss:$4 sm:$0x3]
      %s203 = scalar_lea.vmem %s3, 3
      %v204 = vld [vmem:[%s203] ss:$4 sm:$0x3]
      %v205 = vld [vmem:[%s192] sm:$0xff]
      %v206 = vld [vmem:[%s192 + $0x8] sm:$0xff]
      %v207 = vld [vmem:[%s1] sm:$0xff]
      %v208 = vld [vmem:[%s1 + $0x8] sm:$0xff]
      %v209 = vld [vmem:[%s2] sm:$0xff]
      %v210 = vld [vmem:[%s2 + $0x8] sm:$0xff]
      %211 = vrot.lane.b32.xlu0 %v205, 1
      %v212 = vpop.permute.xlu0 %211
      %213 = vrot.lane.b32.xlu0 0.0, 1
      %v214 = vpop.permute.xlu0 %213
      %215 = vrot.lane.b32.xlu0 %v206, 1
      %v216 = vpop.permute.xlu0 %215
      %v217 = vlaneseq
      %v218 = vand.u32 %v217, 127
      %vm219 = vcmp.lt.s32.totalorder %v218, 1
      %v220 = vsel %vm219, %v212, %v216
      %v221 = vsel %vm219, %v216, %v212
      %v223 = vlaneseq
      %v224 = vshrl.u32 %v223, 7
      %v225 = vsub.s32 0, %v224
      %v226 = vrot.slane %v198, %v225
      %v227 = vlaneseq
      %v228 = vshrl.u32 %v227, 7
      %v229 = vsub.s32 1, %v228
      %v230 = vrot.slane %v198, %v229
      %v233 = vmul.f32 %v221, %v226
      %v234 = vmul.f32 %v220, %v230
      %v235 = vmul.f32 %v214, %v226
      %v236 = vmul.f32 %v214, %v230
      %237 = vrot.lane.b32.xlu0 %v205, 127
      %v238 = vpop.permute.xlu0 %237
      %239 = vrot.lane.b32.xlu0 0.0, 127
      %v240 = vpop.permute.xlu0 %239
      %241 = vrot.lane.b32.xlu0 %v206, 127
      %v242 = vpop.permute.xlu0 %241
      %vm243 = vcmp.lt.s32.totalorder %v218, 127
      %v244 = vsel %vm243, %v238, %v242
      %v245 = vsel %vm243, %v242, %v238
      %v247 = vlaneseq
      %v248 = vshrl.u32 %v247, 7
      %v249 = vsub.s32 0, %v248
      %v250 = vrot.slane %v200, %v249
      %v251 = vlaneseq
      %v252 = vshrl.u32 %v251, 7
      %v253 = vsub.s32 1, %v252
      %v254 = vrot.slane %v200, %v253
      %v257 = vmul.f32 %v244, %v250
      %v258 = vmul.f32 %v245, %v254
      %v259 = vmul.f32 %v240, %v250
      %v260 = vmul.f32 %v240, %v254
      %262 = vset.pattern.permute.xlu0 3
      %263 = vperm.xlu0 %262, %v207
      %v264 = vpop.permute.xlu0 %263
      %267 = vset.pattern.permute.xlu0 3
      %268 = vperm.xlu0 %267, %v208
      %v269 = vpop.permute.xlu0 %268
      %v271 = vmul.f32 %v264, %v233
      %v272 = vmul.f32 %v264, %v234
      %v273 = vmul.f32 %v269, %v235
      %v274 = vmul.f32 %v269, %v236
      %275 = vset.pattern.permute.xlu0 4
      %276 = vperm.xlu0 %275, %v207
      %v277 = vpop.permute.xlu0 %276
      %279 = vset.pattern.permute.xlu0 4
      %280 = vperm.xlu0 %279, %v208
      %v281 = vpop.permute.xlu0 %280
      %v283 = vmul.f32 %v277, %v205
      %v284 = vmul.f32 %v277, %v206
      %v285 = vmul.f32 %v281, 0.0
      %v286 = vadd.f32 %v271, %v283
      %v287 = vadd.f32 %v272, %v284
      %v288 = vadd.f32 %v273, %v285
      %v289 = vadd.f32 %v274, %v285
      %290 = vset.pattern.permute.xlu0 5
      %291 = vperm.xlu0 %290, %v207
      %v292 = vpop.permute.xlu0 %291
      %294 = vset.pattern.permute.xlu0 5
      %295 = vperm.xlu0 %294, %v208
      %v296 = vpop.permute.xlu0 %295
      %v298 = vmul.f32 %v292, %v257
      %v299 = vmul.f32 %v292, %v258
      %v300 = vmul.f32 %v296, %v259
      %v301 = vmul.f32 %v296, %v260
      %v302 = vadd.f32 %v286, %v298
      %v303 = vadd.f32 %v287, %v299
      %v304 = vadd.f32 %v288, %v300
      %v305 = vadd.f32 %v289, %v301
      %306 = vset.pattern.permute.xlu0 0
      %307 = vperm.xlu0 %306, %v207
      %v308 = vpop.permute.xlu0 %307
      %310 = vset.pattern.permute.xlu0 0
      %311 = vperm.xlu0 %310, %v208
      %v312 = vpop.permute.xlu0 %311
      %v314 = vmul.f32 %v308, %v233
      %v315 = vmul.f32 %v308, %v234
      %v316 = vmul.f32 %v312, %v235
      %v317 = vmul.f32 %v312, %v236
      %318 = vset.pattern.permute.xlu0 1
      %319 = vperm.xlu0 %318, %v207
      %v320 = vpop.permute.xlu0 %319
      %322 = vset.pattern.permute.xlu0 1
      %323 = vperm.xlu0 %322, %v208
      %v324 = vpop.permute.xlu0 %323
      %v326 = vmul.f32 %v320, %v205
      %v327 = vmul.f32 %v320, %v206
      %v328 = vmul.f32 %v324, 0.0
      %v329 = vadd.f32 %v314, %v326
      %v330 = vadd.f32 %v315, %v327
      %v331 = vadd.f32 %v316, %v328
      %v332 = vadd.f32 %v317, %v328
      %333 = vset.pattern.permute.xlu0 2
      %334 = vperm.xlu0 %333, %v207
      %v335 = vpop.permute.xlu0 %334
      %337 = vset.pattern.permute.xlu0 2
      %338 = vperm.xlu0 %337, %v208
      %v339 = vpop.permute.xlu0 %338
      %v341 = vmul.f32 %v335, %v257
      %v342 = vmul.f32 %v335, %v258
      %v343 = vmul.f32 %v339, %v259
      %v344 = vmul.f32 %v339, %v260
      %v345 = vadd.f32 %v329, %v341
      %v346 = vadd.f32 %v330, %v342
      %v347 = vadd.f32 %v331, %v343
      %v348 = vadd.f32 %v332, %v344
      %349 = vrot.lane.b32.xlu0 %v345, 16
      %v350 = vpop.permute.xlu0 %349
      %351 = vrot.lane.b32.xlu0 %v347, 16
      %v352 = vpop.permute.xlu0 %351
      %353 = vrot.lane.b32.xlu0 %v346, 16
      %v354 = vpop.permute.xlu0 %353
      %355 = vrot.lane.b32.xlu0 %v348, 16
      %v356 = vpop.permute.xlu0 %355
      %vm357 = vcmp.lt.s32.totalorder %v218, 16
      %v358 = vsel %vm357, %v350, %v354
      %v359 = vsel %vm357, %v352, %v356
      %v360 = vsel %vm357, %v354, %v350
      %v361 = vsel %vm357, %v356, %v352
      %v363 = vlaneseq
      %v364 = vshrl.u32 %v363, 7
      %v365 = vsub.s32 0, %v364
      %v366 = vrot.slane %v202, %v365
      %v367 = vlaneseq
      %v368 = vshrl.u32 %v367, 7
      %v369 = vsub.s32 1, %v368
      %v370 = vrot.slane %v202, %v369
      %v373 = vmul.f32 %v366, %v360
      %v374 = vmul.f32 %v370, %v358
      %v375 = vmul.f32 %v366, %v361
      %v376 = vmul.f32 %v370, %v359
      %v377 = vadd.f32 %v302, %v373
      %v378 = vadd.f32 %v303, %v374
      %v379 = vadd.f32 %v304, %v375
      %v380 = vadd.f32 %v305, %v376
      %381 = vset.pattern.permute.xlu0 6
      %382 = vperm.xlu0 %381, %v207
      %v383 = vpop.permute.xlu0 %382
      %385 = vset.pattern.permute.xlu0 6
      %386 = vperm.xlu0 %385, %v208
      %v387 = vpop.permute.xlu0 %386
      %v389 = vmul.f32 %v383, %v233
      %v390 = vmul.f32 %v383, %v234
      %v391 = vmul.f32 %v387, %v235
      %v392 = vmul.f32 %v387, %v236
      %393 = vset.pattern.permute.xlu0 7
      %394 = vperm.xlu0 %393, %v207
      %v395 = vpop.permute.xlu0 %394
      %397 = vset.pattern.permute.xlu0 7
      %398 = vperm.xlu0 %397, %v208
      %v399 = vpop.permute.xlu0 %398
      %v401 = vmul.f32 %v395, %v205
      %v402 = vmul.f32 %v395, %v206
      %v403 = vmul.f32 %v399, 0.0
      %v404 = vadd.f32 %v389, %v401
      %v405 = vadd.f32 %v390, %v402
      %v406 = vadd.f32 %v391, %v403
      %v407 = vadd.f32 %v392, %v403
      %408 = vset.pattern.permute.xlu0 8
      %409 = vperm.xlu0 %408, %v207
      %v410 = vpop.permute.xlu0 %409
      %412 = vset.pattern.permute.xlu0 8
      %413 = vperm.xlu0 %412, %v208
      %v414 = vpop.permute.xlu0 %413
      %v416 = vmul.f32 %v410, %v257
      %v417 = vmul.f32 %v410, %v258
      %v418 = vmul.f32 %v414, %v259
      %v419 = vmul.f32 %v414, %v260
      %v420 = vadd.f32 %v404, %v416
      %v421 = vadd.f32 %v405, %v417
      %v422 = vadd.f32 %v406, %v418
      %v423 = vadd.f32 %v407, %v419
      %424 = vrot.lane.b32.xlu0 %v420, 112
      %v425 = vpop.permute.xlu0 %424
      %426 = vrot.lane.b32.xlu0 %v422, 112
      %v427 = vpop.permute.xlu0 %426
      %428 = vrot.lane.b32.xlu0 %v421, 112
      %v429 = vpop.permute.xlu0 %428
      %430 = vrot.lane.b32.xlu0 %v423, 112
      %v431 = vpop.permute.xlu0 %430
      %vm432 = vcmp.lt.s32.totalorder %v218, 112
      %v433 = vsel %vm432, %v425, %v429
      %v434 = vsel %vm432, %v427, %v431
      %v435 = vsel %vm432, %v429, %v425
      %v436 = vsel %vm432, %v431, %v427
      %v438 = vlaneseq
      %v439 = vshrl.u32 %v438, 7
      %v440 = vsub.s32 0, %v439
      %v441 = vrot.slane %v204, %v440
      %v442 = vlaneseq
      %v443 = vshrl.u32 %v442, 7
      %v444 = vsub.s32 1, %v443
      %v445 = vrot.slane %v204, %v444
      %v448 = vmul.f32 %v441, %v433
      %v449 = vmul.f32 %v445, %v435
      %v450 = vmul.f32 %v441, %v434
      %v451 = vmul.f32 %v445, %v436
      %v452 = vadd.f32 %v377, %v448
      %v453 = vadd.f32 %v378, %v449
      %v454 = vadd.f32 %v379, %v450
      %v455 = vadd.f32 %v380, %v451
      %456 = vset.pattern.permute.xlu0 9
      %457 = vperm.xlu0 %456, %v207
      %v458 = vpop.permute.xlu0 %457
      %460 = vset.pattern.permute.xlu0 9
      %461 = vperm.xlu0 %460, %v208
      %v462 = vpop.permute.xlu0 %461
      %v464 = vadd.f32 %v452, %v458
      %v465 = vadd.f32 %v453, %v458
      %v466 = vadd.f32 %v454, %v462
      %v467 = vadd.f32 %v455, %v462
      %v468 = vmax.f32 %v464, 0.0
      %v469 = vmax.f32 %v465, 0.0
      %v470 = vmax.f32 %v466, 0.0
      %v471 = vmax.f32 %v467, 0.0
      %472 = vset.pattern.permute.xlu0 10
      %473 = vperm.xlu0 %472, %v207
      %v474 = vpop.permute.xlu0 %473
      %476 = vset.pattern.permute.xlu0 10
      %477 = vperm.xlu0 %476, %v208
      %v478 = vpop.permute.xlu0 %477
      %vm480 = vcmask 130048
      %v482 = vsel %vm480, %v209, 0
      %v485 = vsel %vm480, %v210, 0
      %487 = vmatprep.subr.mxu0 %v469
      %488 = vmatpush1.msra.mxu0 %v468
      %489 = vmatprep.subr.mxu0 %v471
      %490 = vmatpush1.msra.mxu0 %v470
      %491 = vmatprep.subr.mxu0 0.0
      %492 = vmatpush1.msra.mxu0 0.0
      %493 = vmatprep.subr.mxu0 0.0
      %494 = vmatpush1.msra.mxu0 0.0
      %495 = vmatprep.subr.mxu0 0.0
      %496 = vmatpush1.msra.mxu0 0.0
      %497 = vmatprep.subr.mxu0 0.0
      %498 = vmatpush1.msra.mxu0 0.0
      %499 = vmatprep.subr.mxu0 0.0
      %500 = vmatpush1.msra.mxu0 0.0
      %501 = vmatprep.subr.mxu0 0.0
      %502 = vmatpush1.msra.mxu0 0.0
      %503 = vmatprep.subr.mxu0 0.0
      %504 = vmatpush1.msra.mxu0 0.0
      %505 = vmatprep.subr.mxu0 0.0
      %506 = vmatpush1.msra.mxu0 0.0
      %507 = vmatprep.subr.mxu0 0.0
      %508 = vmatpush1.msra.mxu0 0.0
      %509 = vmatprep.subr.mxu0 0.0
      %510 = vmatpush1.msra.mxu0 0.0
      %511 = vmatprep.subr.mxu0 0.0
      %512 = vmatpush1.msra.mxu0 0.0
      %513 = vmatprep.subr.mxu0 0.0
      %514 = vmatpush1.msra.mxu0 0.0
      %515 = vmatprep.subr.mxu0 0.0
      %516 = vmatpush1.msra.mxu0 0.0
      %517 = vmatprep.subr.mxu0 0.0
      %518 = vmatpush1.msra.mxu0 0.0
      %519 = vmatprep.subr.mxu0 0.0
      %520 = vmatpush1.msra.mxu0 0.0
      %521 = vmatprep.subr.mxu0 0.0
      %522 = vmatpush1.msra.mxu0 0.0
      %523 = vmatprep.subr.mxu0 0.0
      %524 = vmatpush1.msra.mxu0 0.0
      %525 = vmatprep.subr.mxu0 0.0
      %526 = vmatpush1.msra.mxu0 0.0
      %527 = vmatprep.subr.mxu0 0.0
      %528 = vmatpush1.msra.mxu0 0.0
      %529 = vmatprep.subr.mxu0 0.0
      %530 = vmatpush1.msra.mxu0 0.0
      %531 = vmatprep.subr.mxu0 0.0
      %532 = vmatpush1.msra.mxu0 0.0
      %533 = vmatprep.subr.mxu0 0.0
      %534 = vmatpush1.msra.mxu0 0.0
      %535 = vmatprep.subr.mxu0 0.0
      %536 = vmatpush1.msra.mxu0 0.0
      %537 = vmatprep.subr.mxu0 0.0
      %538 = vmatpush1.msra.mxu0 0.0
      %539 = vmatprep.subr.mxu0 0.0
      %540 = vmatpush1.msra.mxu0 0.0
      %541 = vmatprep.subr.mxu0 0.0
      %542 = vmatpush1.msra.mxu0 0.0
      %543 = vmatprep.subr.mxu0 0.0
      %544 = vmatpush1.msra.mxu0 0.0
      %545 = vmatprep.subr.mxu0 0.0
      %546 = vmatpush1.msra.mxu0 0.0
      %547 = vmatprep.subr.mxu0 0.0
      %548 = vmatpush1.msra.mxu0 0.0
      %549 = vmatprep.subr.mxu0 0.0
      %550 = vmatpush1.msra.mxu0 0.0
      %551 = vmatprep.mubr.f32.mxu0 0.0
      %552 = vmatmul.mubr.f32.gmra.mrb[0].mxu0 %v482
      %v553 = vpop.f32.mrb[0].mxu0
      %v554 = vadd.f32 %v474, %v553
      %v555 = vpop.f32.mrb[0].mxu0
      %v556 = vadd.f32 %v474, %v555
      %557 = vmatprep.mubr.f32.mxu0 0.0
      %558 = vmatmul.mubr.f32.gmra.mrb[0].mxu0 %v485
      %v559 = vpop.f32.mrb[0].mxu0
      %v560 = vadd.f32 %v478, %v559
      %v561 = vpop.f32.mrb[0].mxu0
      %v562 = vadd.f32 %v478, %v561
      %563 = vdwg.mxu0
      %v564 = vmax.f32 %v554, 0.0
      %v565 = vmax.f32 %v556, 0.0
      %v566 = vmax.f32 %v560, 0.0
      %v567 = vmax.f32 %v562, 0.0
      %v568 = vadd.f32 %v205, %v564
      %v569 = vadd.f32 %v206, %v565
      %v570 = vadd.f32 %v566, 0.0
      %v571 = vadd.f32 %v567, 0.0
      %s572 = scalar_lea.vmem %s1, 16
      %v573 = vld [vmem:[%s572] sm:$0xff]
      %v574 = vld [vmem:[%s572 + $0x8] sm:$0xff]
      %s575 = scalar_lea.vmem %s2, 16
      %v576 = vld [vmem:[%s575] sm:$0xff]
      %v577 = vld [vmem:[%s575 + $0x8] sm:$0xff]
      %578 = vrot.lane.b32.xlu0 %v568, 1
      %v579 = vpop.permute.xlu0 %578
      %580 = vrot.lane.b32.xlu0 %v570, 1
      %v581 = vpop.permute.xlu0 %580
      %582 = vrot.lane.b32.xlu0 %v569, 1
      %v583 = vpop.permute.xlu0 %582
      %584 = vrot.lane.b32.xlu0 %v571, 1
      %v585 = vpop.permute.xlu0 %584
      %v586 = vsel %vm219, %v579, %v583
      %v587 = vsel %vm219, %v581, %v585
      %v588 = vsel %vm219, %v583, %v579
      %v589 = vsel %vm219, %v585, %v581
      %v590 = vmul.f32 %v588, %v226
      %v591 = vmul.f32 %v586, %v230
      %v592 = vmul.f32 %v589, %v226
      %v593 = vmul.f32 %v587, %v230
      %594 = vrot.lane.b32.xlu0 %v568, 127
      %v595 = vpop.permute.xlu0 %594
      %596 = vrot.lane.b32.xlu0 %v570, 127
      %v597 = vpop.permute.xlu0 %596
      %598 = vrot.lane.b32.xlu0 %v569, 127
      %v599 = vpop.permute.xlu0 %598
      %600 = vrot.lane.b32.xlu0 %v571, 127
      %v601 = vpop.permute.xlu0 %600
      %v602 = vsel %vm243, %v595, %v599
      %v603 = vsel %vm243, %v597, %v601
      %v604 = vsel %vm243, %v599, %v595
      %v605 = vsel %vm243, %v601, %v597
      %v606 = vmul.f32 %v602, %v250
      %v607 = vmul.f32 %v604, %v254
      %v608 = vmul.f32 %v603, %v250
      %v609 = vmul.f32 %v605, %v254
      %611 = vset.pattern.permute.xlu0 3
      %612 = vperm.xlu0 %611, %v573
      %v613 = vpop.permute.xlu0 %612
      %616 = vset.pattern.permute.xlu0 3
      %617 = vperm.xlu0 %616, %v574
      %v618 = vpop.permute.xlu0 %617
      %v620 = vmul.f32 %v613, %v590
      %v621 = vmul.f32 %v613, %v591
      %v622 = vmul.f32 %v618, %v592
      %v623 = vmul.f32 %v618, %v593
      %624 = vset.pattern.permute.xlu0 4
      %625 = vperm.xlu0 %624, %v573
      %v626 = vpop.permute.xlu0 %625
      %628 = vset.pattern.permute.xlu0 4
      %629 = vperm.xlu0 %628, %v574
      %v630 = vpop.permute.xlu0 %629
      %v632 = vmul.f32 %v626, %v568
      %v633 = vmul.f32 %v626, %v569
      %v634 = vmul.f32 %v630, %v570
      %v635 = vmul.f32 %v630, %v571
      %v636 = vadd.f32 %v620, %v632
      %v637 = vadd.f32 %v621, %v633
      %v638 = vadd.f32 %v622, %v634
      %v639 = vadd.f32 %v623, %v635
      %640 = vset.pattern.permute.xlu0 5
      %641 = vperm.xlu0 %640, %v573
      %v642 = vpop.permute.xlu0 %641
      %644 = vset.pattern.permute.xlu0 5
      %645 = vperm.xlu0 %644, %v574
      %v646 = vpop.permute.xlu0 %645
      %v648 = vmul.f32 %v642, %v606
      %v649 = vmul.f32 %v642, %v607
      %v650 = vmul.f32 %v646, %v608
      %v651 = vmul.f32 %v646, %v609
      %v652 = vadd.f32 %v636, %v648
      %v653 = vadd.f32 %v637, %v649
      %v654 = vadd.f32 %v638, %v650
      %v655 = vadd.f32 %v639, %v651
      %656 = vset.pattern.permute.xlu0 0
      %657 = vperm.xlu0 %656, %v573
      %v658 = vpop.permute.xlu0 %657
      %660 = vset.pattern.permute.xlu0 0
      %661 = vperm.xlu0 %660, %v574
      %v662 = vpop.permute.xlu0 %661
      %v664 = vmul.f32 %v658, %v590
      %v665 = vmul.f32 %v658, %v591
      %v666 = vmul.f32 %v662, %v592
      %v667 = vmul.f32 %v662, %v593
      %668 = vset.pattern.permute.xlu0 1
      %669 = vperm.xlu0 %668, %v573
      %v670 = vpop.permute.xlu0 %669
      %672 = vset.pattern.permute.xlu0 1
      %673 = vperm.xlu0 %672, %v574
      %v674 = vpop.permute.xlu0 %673
      %v676 = vmul.f32 %v670, %v568
      %v677 = vmul.f32 %v670, %v569
      %v678 = vmul.f32 %v674, %v570
      %v679 = vmul.f32 %v674, %v571
      %v680 = vadd.f32 %v664, %v676
      %v681 = vadd.f32 %v665, %v677
      %v682 = vadd.f32 %v666, %v678
      %v683 = vadd.f32 %v667, %v679
      %684 = vset.pattern.permute.xlu0 2
      %685 = vperm.xlu0 %684, %v573
      %v686 = vpop.permute.xlu0 %685
      %688 = vset.pattern.permute.xlu0 2
      %689 = vperm.xlu0 %688, %v574
      %v690 = vpop.permute.xlu0 %689
      %v692 = vmul.f32 %v686, %v606
      %v693 = vmul.f32 %v686, %v607
      %v694 = vmul.f32 %v690, %v608
      %v695 = vmul.f32 %v690, %v609
      %v696 = vadd.f32 %v680, %v692
      %v697 = vadd.f32 %v681, %v693
      %v698 = vadd.f32 %v682, %v694
      %v699 = vadd.f32 %v683, %v695
      %700 = vrot.lane.b32.xlu0 %v696, 16
      %v701 = vpop.permute.xlu0 %700
      %702 = vrot.lane.b32.xlu0 %v698, 16
      %v703 = vpop.permute.xlu0 %702
      %704 = vrot.lane.b32.xlu0 %v697, 16
      %v705 = vpop.permute.xlu0 %704
      %706 = vrot.lane.b32.xlu0 %v699, 16
      %v707 = vpop.permute.xlu0 %706
      %v708 = vsel %vm357, %v701, %v705
      %v709 = vsel %vm357, %v703, %v707
      %v710 = vsel %vm357, %v705, %v701
      %v711 = vsel %vm357, %v707, %v703
      %v712 = vmul.f32 %v366, %v710
      %v713 = vmul.f32 %v370, %v708
      %v714 = vmul.f32 %v366, %v711
      %v715 = vmul.f32 %v370, %v709
      %v716 = vadd.f32 %v652, %v712
      %v717 = vadd.f32 %v653, %v713
      %v718 = vadd.f32 %v654, %v714
      %v719 = vadd.f32 %v655, %v715
      %720 = vset.pattern.permute.xlu0 6
      %721 = vperm.xlu0 %720, %v573
      %v722 = vpop.permute.xlu0 %721
      %724 = vset.pattern.permute.xlu0 6
      %725 = vperm.xlu0 %724, %v574
      %v726 = vpop.permute.xlu0 %725
      %v728 = vmul.f32 %v722, %v590
      %v729 = vmul.f32 %v722, %v591
      %v730 = vmul.f32 %v726, %v592
      %v731 = vmul.f32 %v726, %v593
      %732 = vset.pattern.permute.xlu0 7
      %733 = vperm.xlu0 %732, %v573
      %v734 = vpop.permute.xlu0 %733
      %736 = vset.pattern.permute.xlu0 7
      %737 = vperm.xlu0 %736, %v574
      %v738 = vpop.permute.xlu0 %737
      %v740 = vmul.f32 %v734, %v568
      %v741 = vmul.f32 %v734, %v569
      %v742 = vmul.f32 %v738, %v570
      %v743 = vmul.f32 %v738, %v571
      %v744 = vadd.f32 %v728, %v740
      %v745 = vadd.f32 %v729, %v741
      %v746 = vadd.f32 %v730, %v742
      %v747 = vadd.f32 %v731, %v743
      %748 = vset.pattern.permute.xlu0 8
      %749 = vperm.xlu0 %748, %v573
      %v750 = vpop.permute.xlu0 %749
      %752 = vset.pattern.permute.xlu0 8
      %753 = vperm.xlu0 %752, %v574
      %v754 = vpop.permute.xlu0 %753
      %v756 = vmul.f32 %v750, %v606
      %v757 = vmul.f32 %v750, %v607
      %v758 = vmul.f32 %v754, %v608
      %v759 = vmul.f32 %v754, %v609
      %v760 = vadd.f32 %v744, %v756
      %v761 = vadd.f32 %v745, %v757
      %v762 = vadd.f32 %v746, %v758
      %v763 = vadd.f32 %v747, %v759
      %764 = vrot.lane.b32.xlu0 %v760, 112
      %v765 = vpop.permute.xlu0 %764
      %766 = vrot.lane.b32.xlu0 %v762, 112
      %v767 = vpop.permute.xlu0 %766
      %768 = vrot.lane.b32.xlu0 %v761, 112
      %v769 = vpop.permute.xlu0 %768
      %770 = vrot.lane.b32.xlu0 %v763, 112
      %v771 = vpop.permute.xlu0 %770
      %v772 = vsel %vm432, %v765, %v769
      %v773 = vsel %vm432, %v767, %v771
      %v774 = vsel %vm432, %v769, %v765
      %v775 = vsel %vm432, %v771, %v767
      %v776 = vmul.f32 %v441, %v772
      %v777 = vmul.f32 %v445, %v774
      %v778 = vmul.f32 %v441, %v773
      %v779 = vmul.f32 %v445, %v775
      %v780 = vadd.f32 %v716, %v776
      %v781 = vadd.f32 %v717, %v777
      %v782 = vadd.f32 %v718, %v778
      %v783 = vadd.f32 %v719, %v779
      %784 = vset.pattern.permute.xlu0 9
      %785 = vperm.xlu0 %784, %v573
      %v786 = vpop.permute.xlu0 %785
      %788 = vset.pattern.permute.xlu0 9
      %789 = vperm.xlu0 %788, %v574
      %v790 = vpop.permute.xlu0 %789
      %v792 = vadd.f32 %v780, %v786
      %v793 = vadd.f32 %v781, %v786
      %v794 = vadd.f32 %v782, %v790
      %v795 = vadd.f32 %v783, %v790
      %v796 = vmax.f32 %v792, 0.0
      %v797 = vmax.f32 %v793, 0.0
      %v798 = vmax.f32 %v794, 0.0
      %v799 = vmax.f32 %v795, 0.0
      %800 = vset.pattern.permute.xlu0 10
      %801 = vperm.xlu0 %800, %v573
      %v802 = vpop.permute.xlu0 %801
      %804 = vset.pattern.permute.xlu0 10
      %805 = vperm.xlu0 %804, %v574
      %v806 = vpop.permute.xlu0 %805
      %v809 = vsel %vm480, %v576, 0
      %v812 = vsel %vm480, %v577, 0
      %814 = vmatprep.subr.mxu0 %v797
      %815 = vmatpush1.msra.mxu0 %v796
      %816 = vmatprep.subr.mxu0 %v799
      %817 = vmatpush1.msra.mxu0 %v798
      %818 = vmatprep.subr.mxu0 0.0
      %819 = vmatpush1.msra.mxu0 0.0
      %820 = vmatprep.subr.mxu0 0.0
      %821 = vmatpush1.msra.mxu0 0.0
      %822 = vmatprep.subr.mxu0 0.0
      %823 = vmatpush1.msra.mxu0 0.0
      %824 = vmatprep.subr.mxu0 0.0
      %825 = vmatpush1.msra.mxu0 0.0
      %826 = vmatprep.subr.mxu0 0.0
      %827 = vmatpush1.msra.mxu0 0.0
      %828 = vmatprep.subr.mxu0 0.0
      %829 = vmatpush1.msra.mxu0 0.0
      %830 = vmatprep.subr.mxu0 0.0
      %831 = vmatpush1.msra.mxu0 0.0
      %832 = vmatprep.subr.mxu0 0.0
      %833 = vmatpush1.msra.mxu0 0.0
      %834 = vmatprep.subr.mxu0 0.0
      %835 = vmatpush1.msra.mxu0 0.0
      %836 = vmatprep.subr.mxu0 0.0
      %837 = vmatpush1.msra.mxu0 0.0
      %838 = vmatprep.subr.mxu0 0.0
      %839 = vmatpush1.msra.mxu0 0.0
      %840 = vmatprep.subr.mxu0 0.0
      %841 = vmatpush1.msra.mxu0 0.0
      %842 = vmatprep.subr.mxu0 0.0
      %843 = vmatpush1.msra.mxu0 0.0
      %844 = vmatprep.subr.mxu0 0.0
      %845 = vmatpush1.msra.mxu0 0.0
      %846 = vmatprep.subr.mxu0 0.0
      %847 = vmatpush1.msra.mxu0 0.0
      %848 = vmatprep.subr.mxu0 0.0
      %849 = vmatpush1.msra.mxu0 0.0
      %850 = vmatprep.subr.mxu0 0.0
      %851 = vmatpush1.msra.mxu0 0.0
      %852 = vmatprep.subr.mxu0 0.0
      %853 = vmatpush1.msra.mxu0 0.0
      %854 = vmatprep.subr.mxu0 0.0
      %855 = vmatpush1.msra.mxu0 0.0
      %856 = vmatprep.subr.mxu0 0.0
      %857 = vmatpush1.msra.mxu0 0.0
      %858 = vmatprep.subr.mxu0 0.0
      %859 = vmatpush1.msra.mxu0 0.0
      %860 = vmatprep.subr.mxu0 0.0
      %861 = vmatpush1.msra.mxu0 0.0
      %862 = vmatprep.subr.mxu0 0.0
      %863 = vmatpush1.msra.mxu0 0.0
      %864 = vmatprep.subr.mxu0 0.0
      %865 = vmatpush1.msra.mxu0 0.0
      %866 = vmatprep.subr.mxu0 0.0
      %867 = vmatpush1.msra.mxu0 0.0
      %868 = vmatprep.subr.mxu0 0.0
      %869 = vmatpush1.msra.mxu0 0.0
      %870 = vmatprep.subr.mxu0 0.0
      %871 = vmatpush1.msra.mxu0 0.0
      %872 = vmatprep.subr.mxu0 0.0
      %873 = vmatpush1.msra.mxu0 0.0
      %874 = vmatprep.subr.mxu0 0.0
      %875 = vmatpush1.msra.mxu0 0.0
      %876 = vmatprep.subr.mxu0 0.0
      %877 = vmatpush1.msra.mxu0 0.0
      %878 = vmatprep.mubr.f32.mxu0 0.0
      %879 = vmatmul.mubr.f32.gmra.mrb[0].mxu0 %v809
      %v880 = vpop.f32.mrb[0].mxu0
      %v881 = vadd.f32 %v802, %v880
      %v882 = vpop.f32.mrb[0].mxu0
      %v883 = vadd.f32 %v802, %v882
      %884 = vmatprep.mubr.f32.mxu0 0.0
      %885 = vmatmul.mubr.f32.gmra.mrb[0].mxu0 %v812
      %v886 = vpop.f32.mrb[0].mxu0
      %v887 = vadd.f32 %v806, %v886
      %v888 = vpop.f32.mrb[0].mxu0
      %v889 = vadd.f32 %v806, %v888
      %890 = vdwg.mxu0
      %v891 = vmax.f32 %v881, 0.0
      %v892 = vmax.f32 %v883, 0.0
      %v893 = vmax.f32 %v887, 0.0
      %v894 = vmax.f32 %v889, 0.0
      %v895 = vadd.f32 %v568, %v891
      %v896 = vadd.f32 %v569, %v892
      %v897 = vadd.f32 %v570, %v893
      %v898 = vadd.f32 %v571, %v894
      %s899 = scalar_lea.vmem %s1, 32
      %v900 = vld [vmem:[%s899] sm:$0xff]
      %v901 = vld [vmem:[%s899 + $0x8] sm:$0xff]
      %s902 = scalar_lea.vmem %s2, 32
      %v903 = vld [vmem:[%s902] sm:$0xff]
      %v904 = vld [vmem:[%s902 + $0x8] sm:$0xff]
      %905 = vrot.lane.b32.xlu0 %v895, 1
      %v906 = vpop.permute.xlu0 %905
      %907 = vrot.lane.b32.xlu0 %v897, 1
      %v908 = vpop.permute.xlu0 %907
      %909 = vrot.lane.b32.xlu0 %v896, 1
      %v910 = vpop.permute.xlu0 %909
      %911 = vrot.lane.b32.xlu0 %v898, 1
      %v912 = vpop.permute.xlu0 %911
      %v913 = vsel %vm219, %v906, %v910
      %v914 = vsel %vm219, %v908, %v912
      %v915 = vsel %vm219, %v910, %v906
      %v916 = vsel %vm219, %v912, %v908
      %v917 = vmul.f32 %v915, %v226
      %v918 = vmul.f32 %v913, %v230
      %v919 = vmul.f32 %v916, %v226
      %v920 = vmul.f32 %v914, %v230
      %921 = vrot.lane.b32.xlu0 %v895, 127
      %v922 = vpop.permute.xlu0 %921
      %923 = vrot.lane.b32.xlu0 %v897, 127
      %v924 = vpop.permute.xlu0 %923
      %925 = vrot.lane.b32.xlu0 %v896, 127
      %v926 = vpop.permute.xlu0 %925
      %927 = vrot.lane.b32.xlu0 %v898, 127
      %v928 = vpop.permute.xlu0 %927
      %v929 = vsel %vm243, %v922, %v926
      %v930 = vsel %vm243, %v924, %v928
      %v931 = vsel %vm243, %v926, %v922
      %v932 = vsel %vm243, %v928, %v924
      %v933 = vmul.f32 %v929, %v250
      %v934 = vmul.f32 %v931, %v254
      %v935 = vmul.f32 %v930, %v250
      %v936 = vmul.f32 %v932, %v254
      %938 = vset.pattern.permute.xlu0 3
      %939 = vperm.xlu0 %938, %v900
      %v940 = vpop.permute.xlu0 %939
      %943 = vset.pattern.permute.xlu0 3
      %944 = vperm.xlu0 %943, %v901
      %v945 = vpop.permute.xlu0 %944
      %v947 = vmul.f32 %v940, %v917
      %v948 = vmul.f32 %v940, %v918
      %v949 = vmul.f32 %v945, %v919
      %v950 = vmul.f32 %v945, %v920
      %951 = vset.pattern.permute.xlu0 4
      %952 = vperm.xlu0 %951, %v900
      %v953 = vpop.permute.xlu0 %952
      %955 = vset.pattern.permute.xlu0 4
      %956 = vperm.xlu0 %955, %v901
      %v957 = vpop.permute.xlu0 %956
      %v959 = vmul.f32 %v953, %v895
      %v960 = vmul.f32 %v953, %v896
      %v961 = vmul.f32 %v957, %v897
      %v962 = vmul.f32 %v957, %v898
      %v963 = vadd.f32 %v947, %v959
      %v964 = vadd.f32 %v948, %v960
      %v965 = vadd.f32 %v949, %v961
      %v966 = vadd.f32 %v950, %v962
      %967 = vset.pattern.permute.xlu0 5
      %968 = vperm.xlu0 %967, %v900
      %v969 = vpop.permute.xlu0 %968
      %971 = vset.pattern.permute.xlu0 5
      %972 = vperm.xlu0 %971, %v901
      %v973 = vpop.permute.xlu0 %972
      %v975 = vmul.f32 %v969, %v933
      %v976 = vmul.f32 %v969, %v934
      %v977 = vmul.f32 %v973, %v935
      %v978 = vmul.f32 %v973, %v936
      %v979 = vadd.f32 %v963, %v975
      %v980 = vadd.f32 %v964, %v976
      %v981 = vadd.f32 %v965, %v977
      %v982 = vadd.f32 %v966, %v978
      %983 = vset.pattern.permute.xlu0 0
      %984 = vperm.xlu0 %983, %v900
      %v985 = vpop.permute.xlu0 %984
      %987 = vset.pattern.permute.xlu0 0
      %988 = vperm.xlu0 %987, %v901
      %v989 = vpop.permute.xlu0 %988
      %v991 = vmul.f32 %v985, %v917
      %v992 = vmul.f32 %v985, %v918
      %v993 = vmul.f32 %v989, %v919
      %v994 = vmul.f32 %v989, %v920
      %995 = vset.pattern.permute.xlu0 1
      %996 = vperm.xlu0 %995, %v900
      %v997 = vpop.permute.xlu0 %996
      %999 = vset.pattern.permute.xlu0 1
      %1000 = vperm.xlu0 %999, %v901
      %v1001 = vpop.permute.xlu0 %1000
      %v1003 = vmul.f32 %v997, %v895
      %v1004 = vmul.f32 %v997, %v896
      %v1005 = vmul.f32 %v1001, %v897
      %v1006 = vmul.f32 %v1001, %v898
      %v1007 = vadd.f32 %v991, %v1003
      %v1008 = vadd.f32 %v992, %v1004
      %v1009 = vadd.f32 %v993, %v1005
      %v1010 = vadd.f32 %v994, %v1006
      %1011 = vset.pattern.permute.xlu0 2
      %1012 = vperm.xlu0 %1011, %v900
      %v1013 = vpop.permute.xlu0 %1012
      %1015 = vset.pattern.permute.xlu0 2
      %1016 = vperm.xlu0 %1015, %v901
      %v1017 = vpop.permute.xlu0 %1016
      %v1019 = vmul.f32 %v1013, %v933
      %v1020 = vmul.f32 %v1013, %v934
      %v1021 = vmul.f32 %v1017, %v935
      %v1022 = vmul.f32 %v1017, %v936
      %v1023 = vadd.f32 %v1007, %v1019
      %v1024 = vadd.f32 %v1008, %v1020
      %v1025 = vadd.f32 %v1009, %v1021
      %v1026 = vadd.f32 %v1010, %v1022
      %1027 = vrot.lane.b32.xlu0 %v1023, 16
      %v1028 = vpop.permute.xlu0 %1027
      %1029 = vrot.lane.b32.xlu0 %v1025, 16
      %v1030 = vpop.permute.xlu0 %1029
      %1031 = vrot.lane.b32.xlu0 %v1024, 16
      %v1032 = vpop.permute.xlu0 %1031
      %1033 = vrot.lane.b32.xlu0 %v1026, 16
      %v1034 = vpop.permute.xlu0 %1033
      %v1035 = vsel %vm357, %v1028, %v1032
      %v1036 = vsel %vm357, %v1030, %v1034
      %v1037 = vsel %vm357, %v1032, %v1028
      %v1038 = vsel %vm357, %v1034, %v1030
      %v1039 = vmul.f32 %v366, %v1037
      %v1040 = vmul.f32 %v370, %v1035
      %v1041 = vmul.f32 %v366, %v1038
      %v1042 = vmul.f32 %v370, %v1036
      %v1043 = vadd.f32 %v979, %v1039
      %v1044 = vadd.f32 %v980, %v1040
      %v1045 = vadd.f32 %v981, %v1041
      %v1046 = vadd.f32 %v982, %v1042
      %1047 = vset.pattern.permute.xlu0 6
      %1048 = vperm.xlu0 %1047, %v900
      %v1049 = vpop.permute.xlu0 %1048
      %1051 = vset.pattern.permute.xlu0 6
      %1052 = vperm.xlu0 %1051, %v901
      %v1053 = vpop.permute.xlu0 %1052
      %v1055 = vmul.f32 %v1049, %v917
      %v1056 = vmul.f32 %v1049, %v918
      %v1057 = vmul.f32 %v1053, %v919
      %v1058 = vmul.f32 %v1053, %v920
      %1059 = vset.pattern.permute.xlu0 7
      %1060 = vperm.xlu0 %1059, %v900
      %v1061 = vpop.permute.xlu0 %1060
      %1063 = vset.pattern.permute.xlu0 7
      %1064 = vperm.xlu0 %1063, %v901
      %v1065 = vpop.permute.xlu0 %1064
      %v1067 = vmul.f32 %v1061, %v895
      %v1068 = vmul.f32 %v1061, %v896
      %v1069 = vmul.f32 %v1065, %v897
      %v1070 = vmul.f32 %v1065, %v898
      %v1071 = vadd.f32 %v1055, %v1067
      %v1072 = vadd.f32 %v1056, %v1068
      %v1073 = vadd.f32 %v1057, %v1069
      %v1074 = vadd.f32 %v1058, %v1070
      %1075 = vset.pattern.permute.xlu0 8
      %1076 = vperm.xlu0 %1075, %v900
      %v1077 = vpop.permute.xlu0 %1076
      %1079 = vset.pattern.permute.xlu0 8
      %1080 = vperm.xlu0 %1079, %v901
      %v1081 = vpop.permute.xlu0 %1080
      %v1083 = vmul.f32 %v1077, %v933
      %v1084 = vmul.f32 %v1077, %v934
      %v1085 = vmul.f32 %v1081, %v935
      %v1086 = vmul.f32 %v1081, %v936
      %v1087 = vadd.f32 %v1071, %v1083
      %v1088 = vadd.f32 %v1072, %v1084
      %v1089 = vadd.f32 %v1073, %v1085
      %v1090 = vadd.f32 %v1074, %v1086
      %1091 = vrot.lane.b32.xlu0 %v1087, 112
      %v1092 = vpop.permute.xlu0 %1091
      %1093 = vrot.lane.b32.xlu0 %v1089, 112
      %v1094 = vpop.permute.xlu0 %1093
      %1095 = vrot.lane.b32.xlu0 %v1088, 112
      %v1096 = vpop.permute.xlu0 %1095
      %1097 = vrot.lane.b32.xlu0 %v1090, 112
      %v1098 = vpop.permute.xlu0 %1097
      %v1099 = vsel %vm432, %v1092, %v1096
      %v1100 = vsel %vm432, %v1094, %v1098
      %v1101 = vsel %vm432, %v1096, %v1092
      %v1102 = vsel %vm432, %v1098, %v1094
      %v1103 = vmul.f32 %v441, %v1099
      %v1104 = vmul.f32 %v445, %v1101
      %v1105 = vmul.f32 %v441, %v1100
      %v1106 = vmul.f32 %v445, %v1102
      %v1107 = vadd.f32 %v1043, %v1103
      %v1108 = vadd.f32 %v1044, %v1104
      %v1109 = vadd.f32 %v1045, %v1105
      %v1110 = vadd.f32 %v1046, %v1106
      %1111 = vset.pattern.permute.xlu0 9
      %1112 = vperm.xlu0 %1111, %v900
      %v1113 = vpop.permute.xlu0 %1112
      %1115 = vset.pattern.permute.xlu0 9
      %1116 = vperm.xlu0 %1115, %v901
      %v1117 = vpop.permute.xlu0 %1116
      %v1119 = vadd.f32 %v1107, %v1113
      %v1120 = vadd.f32 %v1108, %v1113
      %v1121 = vadd.f32 %v1109, %v1117
      %v1122 = vadd.f32 %v1110, %v1117
      %v1123 = vmax.f32 %v1119, 0.0
      %v1124 = vmax.f32 %v1120, 0.0
      %v1125 = vmax.f32 %v1121, 0.0
      %v1126 = vmax.f32 %v1122, 0.0
      %1127 = vset.pattern.permute.xlu0 10
      %1128 = vperm.xlu0 %1127, %v900
      %v1129 = vpop.permute.xlu0 %1128
      %1131 = vset.pattern.permute.xlu0 10
      %1132 = vperm.xlu0 %1131, %v901
      %v1133 = vpop.permute.xlu0 %1132
      %v1136 = vsel %vm480, %v903, 0
      %v1139 = vsel %vm480, %v904, 0
      %1141 = vmatprep.subr.mxu0 %v1124
      %1142 = vmatpush1.msra.mxu0 %v1123
      %1143 = vmatprep.subr.mxu0 %v1126
      %1144 = vmatpush1.msra.mxu0 %v1125
      %1145 = vmatprep.subr.mxu0 0.0
      %1146 = vmatpush1.msra.mxu0 0.0
      %1147 = vmatprep.subr.mxu0 0.0
      %1148 = vmatpush1.msra.mxu0 0.0
      %1149 = vmatprep.subr.mxu0 0.0
      %1150 = vmatpush1.msra.mxu0 0.0
      %1151 = vmatprep.subr.mxu0 0.0
      %1152 = vmatpush1.msra.mxu0 0.0
      %1153 = vmatprep.subr.mxu0 0.0
      %1154 = vmatpush1.msra.mxu0 0.0
      %1155 = vmatprep.subr.mxu0 0.0
      %1156 = vmatpush1.msra.mxu0 0.0
      %1157 = vmatprep.subr.mxu0 0.0
      %1158 = vmatpush1.msra.mxu0 0.0
      %1159 = vmatprep.subr.mxu0 0.0
      %1160 = vmatpush1.msra.mxu0 0.0
      %1161 = vmatprep.subr.mxu0 0.0
      %1162 = vmatpush1.msra.mxu0 0.0
      %1163 = vmatprep.subr.mxu0 0.0
      %1164 = vmatpush1.msra.mxu0 0.0
      %1165 = vmatprep.subr.mxu0 0.0
      %1166 = vmatpush1.msra.mxu0 0.0
      %1167 = vmatprep.subr.mxu0 0.0
      %1168 = vmatpush1.msra.mxu0 0.0
      %1169 = vmatprep.subr.mxu0 0.0
      %1170 = vmatpush1.msra.mxu0 0.0
      %1171 = vmatprep.subr.mxu0 0.0
      %1172 = vmatpush1.msra.mxu0 0.0
      %1173 = vmatprep.subr.mxu0 0.0
      %1174 = vmatpush1.msra.mxu0 0.0
      %1175 = vmatprep.subr.mxu0 0.0
      %1176 = vmatpush1.msra.mxu0 0.0
      %1177 = vmatprep.subr.mxu0 0.0
      %1178 = vmatpush1.msra.mxu0 0.0
      %1179 = vmatprep.subr.mxu0 0.0
      %1180 = vmatpush1.msra.mxu0 0.0
      %1181 = vmatprep.subr.mxu0 0.0
      %1182 = vmatpush1.msra.mxu0 0.0
      %1183 = vmatprep.subr.mxu0 0.0
      %1184 = vmatpush1.msra.mxu0 0.0
      %1185 = vmatprep.subr.mxu0 0.0
      %1186 = vmatpush1.msra.mxu0 0.0
      %1187 = vmatprep.subr.mxu0 0.0
      %1188 = vmatpush1.msra.mxu0 0.0
      %1189 = vmatprep.subr.mxu0 0.0
      %1190 = vmatpush1.msra.mxu0 0.0
      %1191 = vmatprep.subr.mxu0 0.0
      %1192 = vmatpush1.msra.mxu0 0.0
      %1193 = vmatprep.subr.mxu0 0.0
      %1194 = vmatpush1.msra.mxu0 0.0
      %1195 = vmatprep.subr.mxu0 0.0
      %1196 = vmatpush1.msra.mxu0 0.0
      %1197 = vmatprep.subr.mxu0 0.0
      %1198 = vmatpush1.msra.mxu0 0.0
      %1199 = vmatprep.subr.mxu0 0.0
      %1200 = vmatpush1.msra.mxu0 0.0
      %1201 = vmatprep.subr.mxu0 0.0
      %1202 = vmatpush1.msra.mxu0 0.0
      %1203 = vmatprep.subr.mxu0 0.0
      %1204 = vmatpush1.msra.mxu0 0.0
      %1205 = vmatprep.mubr.f32.mxu0 0.0
      %1206 = vmatmul.mubr.f32.gmra.mrb[0].mxu0 %v1136
      %v1207 = vpop.f32.mrb[0].mxu0
      %v1208 = vadd.f32 %v1129, %v1207
      %v1209 = vpop.f32.mrb[0].mxu0
      %v1210 = vadd.f32 %v1129, %v1209
      %1211 = vmatprep.mubr.f32.mxu0 0.0
      %1212 = vmatmul.mubr.f32.gmra.mrb[0].mxu0 %v1139
      %v1213 = vpop.f32.mrb[0].mxu0
      %v1214 = vadd.f32 %v1133, %v1213
      %v1215 = vpop.f32.mrb[0].mxu0
      %v1216 = vadd.f32 %v1133, %v1215
      %1217 = vdwg.mxu0
      %v1218 = vmax.f32 %v1208, 0.0
      %v1219 = vmax.f32 %v1210, 0.0
      %v1220 = vmax.f32 %v1214, 0.0
      %v1221 = vmax.f32 %v1216, 0.0
      %v1222 = vadd.f32 %v895, %v1218
      %v1223 = vadd.f32 %v896, %v1219
      %v1224 = vadd.f32 %v897, %v1220
      %v1225 = vadd.f32 %v898, %v1221
      %s1226 = scalar_lea.vmem %s1, 48
      %v1227 = vld [vmem:[%s1226] sm:$0xff]
      %v1228 = vld [vmem:[%s1226 + $0x8] sm:$0xff]
      %s1229 = scalar_lea.vmem %s2, 48
      %v1230 = vld [vmem:[%s1229] sm:$0xff]
      %v1231 = vld [vmem:[%s1229 + $0x8] sm:$0xff]
      %1232 = vrot.lane.b32.xlu0 %v1222, 1
      %v1233 = vpop.permute.xlu0 %1232
      %1234 = vrot.lane.b32.xlu0 %v1224, 1
      %v1235 = vpop.permute.xlu0 %1234
      %1236 = vrot.lane.b32.xlu0 %v1223, 1
      %v1237 = vpop.permute.xlu0 %1236
      %1238 = vrot.lane.b32.xlu0 %v1225, 1
      %v1239 = vpop.permute.xlu0 %1238
      %v1240 = vsel %vm219, %v1233, %v1237
      %v1241 = vsel %vm219, %v1235, %v1239
      %v1242 = vsel %vm219, %v1237, %v1233
      %v1243 = vsel %vm219, %v1239, %v1235
      %v1244 = vmul.f32 %v1242, %v226
      %v1245 = vmul.f32 %v1240, %v230
      %v1246 = vmul.f32 %v1243, %v226
      %v1247 = vmul.f32 %v1241, %v230
      %1248 = vrot.lane.b32.xlu0 %v1222, 127
      %v1249 = vpop.permute.xlu0 %1248
      %1250 = vrot.lane.b32.xlu0 %v1224, 127
      %v1251 = vpop.permute.xlu0 %1250
      %1252 = vrot.lane.b32.xlu0 %v1223, 127
      %v1253 = vpop.permute.xlu0 %1252
      %1254 = vrot.lane.b32.xlu0 %v1225, 127
      %v1255 = vpop.permute.xlu0 %1254
      %v1256 = vsel %vm243, %v1249, %v1253
      %v1257 = vsel %vm243, %v1251, %v1255
      %v1258 = vsel %vm243, %v1253, %v1249
      %v1259 = vsel %vm243, %v1255, %v1251
      %v1260 = vmul.f32 %v1256, %v250
      %v1261 = vmul.f32 %v1258, %v254
      %v1262 = vmul.f32 %v1257, %v250
      %v1263 = vmul.f32 %v1259, %v254
      %1265 = vset.pattern.permute.xlu0 3
      %1266 = vperm.xlu0 %1265, %v1227
      %v1267 = vpop.permute.xlu0 %1266
      %1270 = vset.pattern.permute.xlu0 3
      %1271 = vperm.xlu0 %1270, %v1228
      %v1272 = vpop.permute.xlu0 %1271
      %v1274 = vmul.f32 %v1267, %v1244
      %v1275 = vmul.f32 %v1267, %v1245
      %v1276 = vmul.f32 %v1272, %v1246
      %v1277 = vmul.f32 %v1272, %v1247
      %1278 = vset.pattern.permute.xlu0 4
      %1279 = vperm.xlu0 %1278, %v1227
      %v1280 = vpop.permute.xlu0 %1279
      %1282 = vset.pattern.permute.xlu0 4
      %1283 = vperm.xlu0 %1282, %v1228
      %v1284 = vpop.permute.xlu0 %1283
      %v1286 = vmul.f32 %v1280, %v1222
      %v1287 = vmul.f32 %v1280, %v1223
      %v1288 = vmul.f32 %v1284, %v1224
      %v1289 = vmul.f32 %v1284, %v1225
      %v1290 = vadd.f32 %v1274, %v1286
      %v1291 = vadd.f32 %v1275, %v1287
      %v1292 = vadd.f32 %v1276, %v1288
      %v1293 = vadd.f32 %v1277, %v1289
      %1294 = vset.pattern.permute.xlu0 5
      %1295 = vperm.xlu0 %1294, %v1227
      %v1296 = vpop.permute.xlu0 %1295
      %1298 = vset.pattern.permute.xlu0 5
      %1299 = vperm.xlu0 %1298, %v1228
      %v1300 = vpop.permute.xlu0 %1299
      %v1302 = vmul.f32 %v1296, %v1260
      %v1303 = vmul.f32 %v1296, %v1261
      %v1304 = vmul.f32 %v1300, %v1262
      %v1305 = vmul.f32 %v1300, %v1263
      %v1306 = vadd.f32 %v1290, %v1302
      %v1307 = vadd.f32 %v1291, %v1303
      %v1308 = vadd.f32 %v1292, %v1304
      %v1309 = vadd.f32 %v1293, %v1305
      %1310 = vset.pattern.permute.xlu0 0
      %1311 = vperm.xlu0 %1310, %v1227
      %v1312 = vpop.permute.xlu0 %1311
      %1314 = vset.pattern.permute.xlu0 0
      %1315 = vperm.xlu0 %1314, %v1228
      %v1316 = vpop.permute.xlu0 %1315
      %v1318 = vmul.f32 %v1312, %v1244
      %v1319 = vmul.f32 %v1312, %v1245
      %v1320 = vmul.f32 %v1316, %v1246
      %v1321 = vmul.f32 %v1316, %v1247
      %1322 = vset.pattern.permute.xlu0 1
      %1323 = vperm.xlu0 %1322, %v1227
      %v1324 = vpop.permute.xlu0 %1323
      %1326 = vset.pattern.permute.xlu0 1
      %1327 = vperm.xlu0 %1326, %v1228
      %v1328 = vpop.permute.xlu0 %1327
      %v1330 = vmul.f32 %v1324, %v1222
      %v1331 = vmul.f32 %v1324, %v1223
      %v1332 = vmul.f32 %v1328, %v1224
      %v1333 = vmul.f32 %v1328, %v1225
      %v1334 = vadd.f32 %v1318, %v1330
      %v1335 = vadd.f32 %v1319, %v1331
      %v1336 = vadd.f32 %v1320, %v1332
      %v1337 = vadd.f32 %v1321, %v1333
      %1338 = vset.pattern.permute.xlu0 2
      %1339 = vperm.xlu0 %1338, %v1227
      %v1340 = vpop.permute.xlu0 %1339
      %1342 = vset.pattern.permute.xlu0 2
      %1343 = vperm.xlu0 %1342, %v1228
      %v1344 = vpop.permute.xlu0 %1343
      %v1346 = vmul.f32 %v1340, %v1260
      %v1347 = vmul.f32 %v1340, %v1261
      %v1348 = vmul.f32 %v1344, %v1262
      %v1349 = vmul.f32 %v1344, %v1263
      %v1350 = vadd.f32 %v1334, %v1346
      %v1351 = vadd.f32 %v1335, %v1347
      %v1352 = vadd.f32 %v1336, %v1348
      %v1353 = vadd.f32 %v1337, %v1349
      %1354 = vrot.lane.b32.xlu0 %v1350, 16
      %v1355 = vpop.permute.xlu0 %1354
      %1356 = vrot.lane.b32.xlu0 %v1352, 16
      %v1357 = vpop.permute.xlu0 %1356
      %1358 = vrot.lane.b32.xlu0 %v1351, 16
      %v1359 = vpop.permute.xlu0 %1358
      %1360 = vrot.lane.b32.xlu0 %v1353, 16
      %v1361 = vpop.permute.xlu0 %1360
      %v1362 = vsel %vm357, %v1355, %v1359
      %v1363 = vsel %vm357, %v1357, %v1361
      %v1364 = vsel %vm357, %v1359, %v1355
      %v1365 = vsel %vm357, %v1361, %v1357
      %v1366 = vmul.f32 %v366, %v1364
      %v1367 = vmul.f32 %v370, %v1362
      %v1368 = vmul.f32 %v366, %v1365
      %v1369 = vmul.f32 %v370, %v1363
      %v1370 = vadd.f32 %v1306, %v1366
      %v1371 = vadd.f32 %v1307, %v1367
      %v1372 = vadd.f32 %v1308, %v1368
      %v1373 = vadd.f32 %v1309, %v1369
      %1374 = vset.pattern.permute.xlu0 6
      %1375 = vperm.xlu0 %1374, %v1227
      %v1376 = vpop.permute.xlu0 %1375
      %1378 = vset.pattern.permute.xlu0 6
      %1379 = vperm.xlu0 %1378, %v1228
      %v1380 = vpop.permute.xlu0 %1379
      %v1382 = vmul.f32 %v1376, %v1244
      %v1383 = vmul.f32 %v1376, %v1245
      %v1384 = vmul.f32 %v1380, %v1246
      %v1385 = vmul.f32 %v1380, %v1247
      %1386 = vset.pattern.permute.xlu0 7
      %1387 = vperm.xlu0 %1386, %v1227
      %v1388 = vpop.permute.xlu0 %1387
      %1390 = vset.pattern.permute.xlu0 7
      %1391 = vperm.xlu0 %1390, %v1228
      %v1392 = vpop.permute.xlu0 %1391
      %v1394 = vmul.f32 %v1388, %v1222
      %v1395 = vmul.f32 %v1388, %v1223
      %v1396 = vmul.f32 %v1392, %v1224
      %v1397 = vmul.f32 %v1392, %v1225
      %v1398 = vadd.f32 %v1382, %v1394
      %v1399 = vadd.f32 %v1383, %v1395
      %v1400 = vadd.f32 %v1384, %v1396
      %v1401 = vadd.f32 %v1385, %v1397
      %1402 = vset.pattern.permute.xlu0 8
      %1403 = vperm.xlu0 %1402, %v1227
      %v1404 = vpop.permute.xlu0 %1403
      %1406 = vset.pattern.permute.xlu0 8
      %1407 = vperm.xlu0 %1406, %v1228
      %v1408 = vpop.permute.xlu0 %1407
      %v1410 = vmul.f32 %v1404, %v1260
      %v1411 = vmul.f32 %v1404, %v1261
      %v1412 = vmul.f32 %v1408, %v1262
      %v1413 = vmul.f32 %v1408, %v1263
      %v1414 = vadd.f32 %v1398, %v1410
      %v1415 = vadd.f32 %v1399, %v1411
      %v1416 = vadd.f32 %v1400, %v1412
      %v1417 = vadd.f32 %v1401, %v1413
      %1418 = vrot.lane.b32.xlu0 %v1414, 112
      %v1419 = vpop.permute.xlu0 %1418
      %1420 = vrot.lane.b32.xlu0 %v1416, 112
      %v1421 = vpop.permute.xlu0 %1420
      %1422 = vrot.lane.b32.xlu0 %v1415, 112
      %v1423 = vpop.permute.xlu0 %1422
      %1424 = vrot.lane.b32.xlu0 %v1417, 112
      %v1425 = vpop.permute.xlu0 %1424
      %v1426 = vsel %vm432, %v1419, %v1423
      %v1427 = vsel %vm432, %v1421, %v1425
      %v1428 = vsel %vm432, %v1423, %v1419
      %v1429 = vsel %vm432, %v1425, %v1421
      %v1430 = vmul.f32 %v441, %v1426
      %v1431 = vmul.f32 %v445, %v1428
      %v1432 = vmul.f32 %v441, %v1427
      %v1433 = vmul.f32 %v445, %v1429
      %v1434 = vadd.f32 %v1370, %v1430
      %v1435 = vadd.f32 %v1371, %v1431
      %v1436 = vadd.f32 %v1372, %v1432
      %v1437 = vadd.f32 %v1373, %v1433
      %1438 = vset.pattern.permute.xlu0 9
      %1439 = vperm.xlu0 %1438, %v1227
      %v1440 = vpop.permute.xlu0 %1439
      %1442 = vset.pattern.permute.xlu0 9
      %1443 = vperm.xlu0 %1442, %v1228
      %v1444 = vpop.permute.xlu0 %1443
      %v1446 = vadd.f32 %v1434, %v1440
      %v1447 = vadd.f32 %v1435, %v1440
      %v1448 = vadd.f32 %v1436, %v1444
      %v1449 = vadd.f32 %v1437, %v1444
      %v1450 = vmax.f32 %v1446, 0.0
      %v1451 = vmax.f32 %v1447, 0.0
      %v1452 = vmax.f32 %v1448, 0.0
      %v1453 = vmax.f32 %v1449, 0.0
      %1454 = vset.pattern.permute.xlu0 10
      %1455 = vperm.xlu0 %1454, %v1227
      %v1456 = vpop.permute.xlu0 %1455
      %1458 = vset.pattern.permute.xlu0 10
      %1459 = vperm.xlu0 %1458, %v1228
      %v1460 = vpop.permute.xlu0 %1459
      %v1463 = vsel %vm480, %v1230, 0
      %v1466 = vsel %vm480, %v1231, 0
      %1468 = vmatprep.subr.mxu0 %v1451
      %1469 = vmatpush1.msra.mxu0 %v1450
      %1470 = vmatprep.subr.mxu0 %v1453
      %1471 = vmatpush1.msra.mxu0 %v1452
      %1472 = vmatprep.subr.mxu0 0.0
      %1473 = vmatpush1.msra.mxu0 0.0
      %1474 = vmatprep.subr.mxu0 0.0
      %1475 = vmatpush1.msra.mxu0 0.0
      %1476 = vmatprep.subr.mxu0 0.0
      %1477 = vmatpush1.msra.mxu0 0.0
      %1478 = vmatprep.subr.mxu0 0.0
      %1479 = vmatpush1.msra.mxu0 0.0
      %1480 = vmatprep.subr.mxu0 0.0
      %1481 = vmatpush1.msra.mxu0 0.0
      %1482 = vmatprep.subr.mxu0 0.0
      %1483 = vmatpush1.msra.mxu0 0.0
      %1484 = vmatprep.subr.mxu0 0.0
      %1485 = vmatpush1.msra.mxu0 0.0
      %1486 = vmatprep.subr.mxu0 0.0
      %1487 = vmatpush1.msra.mxu0 0.0
      %1488 = vmatprep.subr.mxu0 0.0
      %1489 = vmatpush1.msra.mxu0 0.0
      %1490 = vmatprep.subr.mxu0 0.0
      %1491 = vmatpush1.msra.mxu0 0.0
      %1492 = vmatprep.subr.mxu0 0.0
      %1493 = vmatpush1.msra.mxu0 0.0
      %1494 = vmatprep.subr.mxu0 0.0
      %1495 = vmatpush1.msra.mxu0 0.0
      %1496 = vmatprep.subr.mxu0 0.0
      %1497 = vmatpush1.msra.mxu0 0.0
      %1498 = vmatprep.subr.mxu0 0.0
      %1499 = vmatpush1.msra.mxu0 0.0
      %1500 = vmatprep.subr.mxu0 0.0
      %1501 = vmatpush1.msra.mxu0 0.0
      %1502 = vmatprep.subr.mxu0 0.0
      %1503 = vmatpush1.msra.mxu0 0.0
      %1504 = vmatprep.subr.mxu0 0.0
      %1505 = vmatpush1.msra.mxu0 0.0
      %1506 = vmatprep.subr.mxu0 0.0
      %1507 = vmatpush1.msra.mxu0 0.0
      %1508 = vmatprep.subr.mxu0 0.0
      %1509 = vmatpush1.msra.mxu0 0.0
      %1510 = vmatprep.subr.mxu0 0.0
      %1511 = vmatpush1.msra.mxu0 0.0
      %1512 = vmatprep.subr.mxu0 0.0
      %1513 = vmatpush1.msra.mxu0 0.0
      %1514 = vmatprep.subr.mxu0 0.0
      %1515 = vmatpush1.msra.mxu0 0.0
      %1516 = vmatprep.subr.mxu0 0.0
      %1517 = vmatpush1.msra.mxu0 0.0
      %1518 = vmatprep.subr.mxu0 0.0
      %1519 = vmatpush1.msra.mxu0 0.0
      %1520 = vmatprep.subr.mxu0 0.0
      %1521 = vmatpush1.msra.mxu0 0.0
      %1522 = vmatprep.subr.mxu0 0.0
      %1523 = vmatpush1.msra.mxu0 0.0
      %1524 = vmatprep.subr.mxu0 0.0
      %1525 = vmatpush1.msra.mxu0 0.0
      %1526 = vmatprep.subr.mxu0 0.0
      %1527 = vmatpush1.msra.mxu0 0.0
      %1528 = vmatprep.subr.mxu0 0.0
      %1529 = vmatpush1.msra.mxu0 0.0
      %1530 = vmatprep.subr.mxu0 0.0
      %1531 = vmatpush1.msra.mxu0 0.0
      %1532 = vmatprep.mubr.f32.mxu0 0.0
      %1533 = vmatmul.mubr.f32.gmra.mrb[0].mxu0 %v1463
      %v1534 = vpop.f32.mrb[0].mxu0
      %v1535 = vadd.f32 %v1456, %v1534
      %v1536 = vpop.f32.mrb[0].mxu0
      %v1537 = vadd.f32 %v1456, %v1536
      %1538 = vmatprep.mubr.f32.mxu0 0.0
      %1539 = vmatmul.mubr.f32.gmra.mrb[0].mxu0 %v1466
      %v1540 = vpop.f32.mrb[0].mxu0
      %v1541 = vadd.f32 %v1460, %v1540
      %v1542 = vpop.f32.mrb[0].mxu0
      %v1543 = vadd.f32 %v1460, %v1542
      %1544 = vdwg.mxu0
      %v1545 = vmax.f32 %v1535, 0.0
      %v1546 = vmax.f32 %v1537, 0.0
      %v1547 = vmax.f32 %v1541, 0.0
      %v1548 = vmax.f32 %v1543, 0.0
      %v1549 = vadd.f32 %v1222, %v1545
      %v1550 = vadd.f32 %v1223, %v1546
      %v1551 = vadd.f32 %v1224, %v1547
      %v1552 = vadd.f32 %v1225, %v1548
      %1553 = vst [vmem:[%s197] sm:$0xff] %v1549
      %1554 = vst [vmem:[%s197 + $0x8] sm:$0xff] %v1550
      %1555 = vst [vmem:[%s197 + $0x10] sm:$0xff] %v1551
      %1556 = vst [vmem:[%s197 + $0x18] sm:$0xff] %v1552
      %p1557 = scmp.lt.s32.totalorder %s15, 1
      %s1558 = scalar_select %p1557, %s15, 1
      %s1559 = smul.addr %s1558, 4
      %s1560 = smul.addr %s1559, 8
      %s1561 = scalar_lea.vmem %s4, %s1560
      // Predicated region
      $region37: #{dense_block_pallas.1} parent=35 // pred_check
        %p1562 = pneg %p122
      $region38: #{dense_block_pallas.1} parent=35 // pred_check_branch
        %1564 = sbr.rel (%p1562) target = $region40
      $region39: #{dense_block_pallas.1} parent=35 // pred_region
        _
      $region40: #{dense_block_pallas.1} parent=35 // pred_fallthru
        _
    $region36: #{dense_block_pallas.1} parent=5 // pred_fallthru
      _
    %p1565 = scmp.le.s32.totalorder 2, %s10
    // Predicated region
    $region41: #{dense_block_pallas.1} parent=5 // pred_check
      %p1566 = pneg %p1565
    $region42: #{dense_block_pallas.1} parent=5 // pred_check_branch
      %1568 = sbr.rel (%p1566) target = $region44
    $region43: #{dense_block_pallas.1} parent=5 // pred_region
      %s1569 = ssub.s32 %s10, 2
      // Predicated region
      $region45: #{dense_block_pallas.1} parent=43 // pred_check
        %p1570 = pneg %p128
      $region46: #{dense_block_pallas.1} parent=43 // pred_check_branch
        %1572 = sbr.rel (%p1570) target = $region48
      $region47: #{dense_block_pallas.1} parent=43 // pred_region
        %p1573 = scmp.lt.s32.totalorder %s16, 1
        %s1574 = scalar_select %p1573, %s16, 1
        %s1575 = smul.addr %s1574, 4
        %s1576 = smul.addr %s1575, 8
        %s1577 = scalar_lea.vmem %s4, %s1576
      $region48: #{dense_block_pallas.1} parent=43 // pred_fallthru
        _
    $region44: #{dense_block_pallas.1} parent=5 // pred_fallthru
      _
  $region6: #{dense_block_pallas.1} parent=0 // loop_footer
    %s14 = sadd.s32 1, %s10
  $region7: #{dense_block_pallas.1} parent=0 // loop_footer_branch
    %9 = sbr.rel target = $region3
  $region8: #{dense_block_pallas.1} parent=0 // loop_exit
    _

</llo_original>
